<compile_context>
chip_gen: v7x
topology: tpu7x:2x2x1
jax: 0.10.0
libtpu: 0.0.40
codegen_flags: <defaults>
</compile_context>

<pallas_src>
import functools

import jax
import jax.numpy as jnp
import numpy as np
from jax.experimental import pallas as pl
from jax.experimental.pallas import tpu as pltpu

LANES = 128


def _round_up(x, m):
    return (x + m - 1) // m * m


# ----------------------------------------------------------------------------
# Fused Pallas kernel: one grid step == one image.
# ----------------------------------------------------------------------------
def _disc_fused_kernel(pb_ref, w1_ref, w2_ref, wfc_ref, o_ref, *, slope):
    feat = w1_ref.shape[1]              # conv1 output channels
    f2 = w2_ref.shape[1]                # conv2 output channels
    hw2 = wfc_ref.shape[0]              # H2*W2 spatial positions after conv2
    n_taps = w2_ref.shape[0] // feat    # 25 (5x5 kernel taps)

    def lrelu(v):
        return jnp.where(v >= 0.0, v, jnp.float32(slope) * v)

    # ---- conv1 as one GEMM over all (tap, oh, ow) rows of this image -------
    patches = pb_ref[0]                                        # (n_taps*hw2, Kp) bf16
    y1 = jnp.dot(patches, w1_ref[...],
                 preferred_element_type=jnp.float32)           # f32 accumulate
    y1 = lrelu(y1).astype(jnp.bfloat16)                        # (n_taps*hw2, feat)

    # ---- conv2: accumulate the 25 kernel taps as small aligned GEMMs -------
    # Tap t's activations occupy rows [t*hw2, (t+1)*hw2) of y1 and its weights
    # rows [t*feat, (t+1)*feat) of w2_ref (both multiples of 8) — static,
    # aligned slices, no data relayout.
    acc = jnp.zeros((hw2, f2), jnp.float32)
    for t in range(n_taps):
        lhs = y1[t * hw2:(t + 1) * hw2, :]                     # (hw2, feat) bf16
        rhs = w2_ref[t * feat:(t + 1) * feat, :]               # (feat, f2)  bf16
        acc = acc + jnp.dot(lhs, rhs, preferred_element_type=jnp.float32)
    y2 = lrelu(acc)                                            # (hw2, f2) f32

    # ---- FC head as a VPU/XLU reduction (avoids a 1-lane-wide MXU output) --
    prod = y2 * wfc_ref[...]                                   # (hw2, f2) f32
    r = jnp.sum(prod, axis=1, keepdims=True)                   # lane reduce
    r = jnp.sum(r, axis=0, keepdims=True)                      # sublane reduce -> (1,1)
    # single fused, lane-dense (1,128) store of the logit (broadcast).
    o_ref[...] = jnp.broadcast_to(r.reshape(1, 1, 1), (1, 1, LANES))


# ----------------------------------------------------------------------------
# XLA glue (gathers/pads/reshapes only, no FLOPs) — fused under jit
# ----------------------------------------------------------------------------
def _im2col_k5_s2_p2(x_nhwc, ho, wo):
    """(N,H,W,C) -> (N,ho,wo,C*25); column order c*25 + kh*5 + kw (matches a
    flattened PyTorch (O, I, KH, KW) weight)."""
    n, h, w, c = x_nhwc.shape
    xp = jnp.pad(x_nhwc, ((0, 0), (2, 2), (2, 2), (0, 0)))
    cols = []
    for kh in range(5):
        for kw in range(5):
            cols.append(xp[:, kh:kh + 2 * ho:2, kw:kw + 2 * wo:2, :])
    p = jnp.stack(cols, axis=-1)                    # (N,ho,wo,C,25)
    return p.reshape(n, ho, wo, c * 25)


def _build_conv2_ordered_patches(x_nchw, k_pad):
    """Gather conv1 patches in conv2-patch (tap-major) row order.

    Per-image row layout: (tap2, oh, ow) with tap2 = kh2*5 + kw2.  Rows that
    land in conv2's zero padding are all-zero; since conv1 has no bias,
    lrelu(0 @ W1) == 0 reproduces the padding exactly.
    Returns (N, 25*H2*W2, k_pad) bf16 (K zero-padded to a lane multiple).
    """
    n, c, h, w = x_nchw.shape
    h1, w1 = h // 2, w // 2
    h2, w2 = h // 4, w // 4
    x = jnp.transpose(x_nchw, (0, 2, 3, 1)).astype(jnp.bfloat16)   # NCHW -> NHWC
    p1 = _im2col_k5_s2_p2(x, h1, w1)                               # (N,h1,w1,C*25)
    p1p = jnp.pad(p1, ((0, 0), (2, 2), (2, 2), (0, 0)))            # conv2 padding
    taps = []
    for kh in range(5):
        for kw in range(5):
            taps.append(p1p[:, kh:kh + 2 * h2:2, kw:kw + 2 * w2:2, :])
    pb = jnp.stack(taps, axis=1)                                   # (N,25,h2,w2,C*25)
    pb = pb.reshape(n, 25 * h2 * w2, c * 25)
    return jnp.pad(pb, ((0, 0), (0, 0), (0, k_pad - c * 25)))


# ----------------------------------------------------------------------------
# One-time weight preprocessing (hoisted out of the forward pass)
# ----------------------------------------------------------------------------
def prepare_params(params):
    """Re-lay-out the (bias-free) PyTorch weights into MXU/kernel form."""
    w1 = params["conv1"]            # (feat,   C,    5, 5)
    w2 = params["conv2"]            # (2*feat, feat, 5, 5)
    wfc = params["fc"]              # (1, 2*feat*ds*ds)
    feat, c = int(w1.shape[0]), int(w1.shape[1])
    f2 = int(w2.shape[0])
    ds = int(round((wfc.shape[1] // f2) ** 0.5))
    k1 = c * 25
    k_pad = _round_up(k1, LANES)

    # conv1: (C*25, feat), K zero-padded to 128, bf16
    w1m = jnp.pad(w1.reshape(feat, k1).T, ((0, k_pad - k1), (0, 0)))
    w1m = w1m.astype(jnp.bfloat16)
    # conv2: rows ordered (kh, kw, cin) == tap-major, matching the patch rows
    w2m = jnp.transpose(w2, (2, 3, 1, 0)).reshape(25 * feat, f2).astype(jnp.bfloat16)
    # fc: permuted to (spatial, channel) so it matches y2's in-kernel layout
    # (equivalent to PyTorch's NCHW flatten); kept f32 for the reduction.
    wfc_m = jnp.transpose(wfc.reshape(f2, ds, ds), (1, 2, 0)).reshape(ds * ds, f2)
    return {"w1m": w1m, "w2m": w2m, "wfc_m": wfc_m.astype(jnp.float32)}


# ----------------------------------------------------------------------------
# Forward (eval semantics: Dropout == identity)
# ----------------------------------------------------------------------------
@functools.partial(jax.jit, static_argnames=("slope",))
def discriminator_forward(x_nchw, prep, slope=0.3):
    w1m, w2m, wfc_m = prep["w1m"], prep["w2m"], prep["wfc_m"]
    n = x_nchw.shape[0]
    k_pad = w1m.shape[0]
    feat = w1m.shape[1]
    f2 = w2m.shape[1]
    hw2 = wfc_m.shape[0]
    t_rows = 25 * hw2

    assert x_nchw.shape[2] % 4 == 0 and x_nchw.shape[3] % 4 == 0
    assert hw2 % 8 == 0 and feat % 8 == 0, "tap blocks must be sublane-aligned"

    pb = _build_conv2_ordered_patches(x_nchw, k_pad)       # (N, t_rows, k_pad) bf16

    out = pl.pallas_call(
        functools.partial(_disc_fused_kernel, slope=slope),
        out_shape=jax.ShapeDtypeStruct((n, 1, LANES), jnp.float32),
        grid=(n,),
        in_specs=[
            pl.BlockSpec((1, t_rows, k_pad), lambda i: (i, 0, 0)),   # per-image patches
            pl.BlockSpec((k_pad, feat), lambda i: (0, 0)),           # conv1 weights
            pl.BlockSpec((25 * feat, f2), lambda i: (0, 0)),         # conv2 weights
            pl.BlockSpec((hw2, f2), lambda i: (0, 0)),               # fc weights
        ],
        out_specs=pl.BlockSpec((1, 1, LANES), lambda i: (i, 0, 0)),
        compiler_params=pltpu.CompilerParams(
            dimension_semantics=("parallel",)),
    )(pb, w1m, w2m, wfc_m)

    return out[:, 0, 0]                                    # (N,)


# ----------------------------------------------------------------------------
# Pure-JAX reference (f32, HIGHEST precision)
# ----------------------------------------------------------------------------
def reference_forward(x_nchw, params, slope=0.3):
    def conv(x, w):
        return jax.lax.conv_general_dilated(
            x, w, window_strides=(2, 2), padding=[(2, 2), (2, 2)],
            dimension_numbers=("NCHW", "OIHW", "NCHW"),
            precision=jax.lax.Precision.HIGHEST)

    def lrelu(v):
        return jnp.where(v >= 0, v, slope * v)

    y = lrelu(conv(x_nchw, params["conv1"]))   # Dropout(eval) = identity
    y = lrelu(conv(y, params["conv2"]))
    flat = y.reshape(y.shape[0], -1)
    return (flat @ params["fc"].T).reshape(-1)


# ----------------------------------------------------------------------------
if __name__ == "__main__":
    # Small, module-consistent shapes: config.CHANNELS=3, config.IMG_SIZE=16
    batch, channels, img_size, feat, slope = 2, 3, 16, 16, 0.3
    ds = img_size // 4

    key = jax.random.PRNGKey(0)
    kx, k1, k2, k3 = jax.random.split(key, 4)

    x = jax.random.normal(kx, (batch, channels, img_size, img_size), jnp.float32)
    params = {
        "conv1": 0.05 * jax.random.normal(k1, (feat, channels, 5, 5), jnp.float32),
        "conv2": 0.05 * jax.random.normal(k2, (feat * 2, feat, 5, 5), jnp.float32),
        "fc": 0.05 * jax.random.normal(k3, (1, feat * 2 * ds * ds), jnp.float32),
    }

    prep = prepare_params(params)                      # one-time weight re-layout
    out = discriminator_forward(x, prep, slope=slope)
    out = jax.block_until_ready(out)

    ref = jax.block_until_ready(reference_forward(x, params, slope=slope))
    assert out.shape == (batch,), out.shape
    # Tolerance sized for bf16 MXU inputs with f32 accumulation.
    np.testing.assert_allclose(np.asarray(out), np.asarray(ref),
                               rtol=2e-2, atol=2e-2)

    print("KERNEL_OK")
</pallas_src>

<mosaic_0001>
module attributes {stable_mosaic.version = 11 : i64} {
  func.func @_disc_fused_kernel(%arg0: i32, %arg1: memref<1x400x128xbf16, #tpu.memory_space<vmem>>, %arg2: memref<128x16xbf16, #tpu.memory_space<vmem>>, %arg3: memref<400x32xbf16, #tpu.memory_space<vmem>>, %arg4: memref<16x32xf32, #tpu.memory_space<vmem>>, %arg5: memref<1x1x128xf32, #tpu.memory_space<vmem>>) attributes {dimension_semantics = [#tpu.dimension_semantics<parallel>], iteration_bounds = array<i64: 2>, scalar_prefetch = 0 : i64, scratch_operands = 0 : i64, tpu.core_type = #tpu.core_type<tc>, window_params = [{transform_indices = @transform_0, window_bounds = array<i64: 1, 400, 128>}, {pipeline_mode = #tpu.pipeline_mode<synchronous>, transform_indices = @transform_1, window_bounds = array<i64: 128, 16>}, {pipeline_mode = #tpu.pipeline_mode<synchronous>, transform_indices = @transform_2, window_bounds = array<i64: 400, 32>}, {pipeline_mode = #tpu.pipeline_mode<synchronous>, transform_indices = @transform_3, window_bounds = array<i64: 16, 32>}, {transform_indices = @transform_4, window_bounds = array<i64: 1, 1, 128>}]} {
    %c0 = arith.constant 0 : index
    %c0_0 = arith.constant 0 : index
    %c0_1 = arith.constant 0 : index
    %0 = vector.load %arg1[%c0, %c0_0, %c0_1] : memref<1x400x128xbf16, #tpu.memory_space<vmem>>, vector<1x400x128xbf16>
    %1 = vector.shape_cast %0 : vector<1x400x128xbf16> to vector<400x128xbf16>
    %c0_2 = arith.constant 0 : index
    %c0_3 = arith.constant 0 : index
    %2 = vector.load %arg2[%c0_2, %c0_3] : memref<128x16xbf16, #tpu.memory_space<vmem>>, vector<128x16xbf16>
    %cst = arith.constant dense<0.000000e+00> : vector<400x16xf32>
    %3 = tpu.matmul %1, %2, %cst {dimension_numbers = #tpu.dot_dimension_numbers<[1], [0], [0], [1], [0, 0, 1, 1], [], []>} : vector<400x128xbf16>, vector<128x16xbf16>, vector<400x16xf32> -> vector<400x16xf32>
    %cst_4 = arith.constant 0.000000e+00 : f32
    %4 = vector.broadcast %cst_4 : f32 to vector<400x16xf32>
    %5 = arith.cmpf oge, %3, %4 : vector<400x16xf32>
    %cst_5 = arith.constant 3.000000e-01 : f32
    %6 = vector.broadcast %cst_5 : f32 to vector<400x16xf32>
    %7 = arith.mulf %6, %3 : vector<400x16xf32>
    %8 = arith.select %5, %3, %7 : vector<400x16xi1>, vector<400x16xf32>
    %9 = arith.truncf %8 : vector<400x16xf32> to vector<400x16xbf16>
    %cst_6 = arith.constant 0.000000e+00 : f32
    %10 = vector.broadcast %cst_6 : f32 to vector<16x32xf32>
    %11 = vector.extract_strided_slice %9 {offsets = [0, 0], sizes = [16, 16], strides = [1, 1]} : vector<400x16xbf16> to vector<16x16xbf16>
    %c0_7 = arith.constant 0 : index
    %c0_8 = arith.constant 0 : index
    %12 = vector.load %arg3[%c0_7, %c0_8] : memref<400x32xbf16, #tpu.memory_space<vmem>>, vector<16x32xbf16>
    %cst_9 = arith.constant dense<0.000000e+00> : vector<16x32xf32>
    %13 = tpu.matmul %11, %12, %cst_9 {dimension_numbers = #tpu.dot_dimension_numbers<[1], [0], [0], [1], [0, 0, 1, 1], [], []>} : vector<16x16xbf16>, vector<16x32xbf16>, vector<16x32xf32> -> vector<16x32xf32>
    %14 = arith.addf %10, %13 : vector<16x32xf32>
    %15 = vector.extract_strided_slice %9 {offsets = [16, 0], sizes = [16, 16], strides = [1, 1]} : vector<400x16xbf16> to vector<16x16xbf16>
    %c16 = arith.constant 16 : index
    %c0_10 = arith.constant 0 : index
    %16 = vector.load %arg3[%c16, %c0_10] : memref<400x32xbf16, #tpu.memory_space<vmem>>, vector<16x32xbf16>
    %cst_11 = arith.constant dense<0.000000e+00> : vector<16x32xf32>
    %17 = tpu.matmul %15, %16, %cst_11 {dimension_numbers = #tpu.dot_dimension_numbers<[1], [0], [0], [1], [0, 0, 1, 1], [], []>} : vector<16x16xbf16>, vector<16x32xbf16>, vector<16x32xf32> -> vector<16x32xf32>
    %18 = arith.addf %14, %17 : vector<16x32xf32>
    %19 = vector.extract_strided_slice %9 {offsets = [32, 0], sizes = [16, 16], strides = [1, 1]} : vector<400x16xbf16> to vector<16x16xbf16>
    %c32 = arith.constant 32 : index
    %c0_12 = arith.constant 0 : index
    %20 = vector.load %arg3[%c32, %c0_12] : memref<400x32xbf16, #tpu.memory_space<vmem>>, vector<16x32xbf16>
    %cst_13 = arith.constant dense<0.000000e+00> : vector<16x32xf32>
    %21 = tpu.matmul %19, %20, %cst_13 {dimension_numbers = #tpu.dot_dimension_numbers<[1], [0], [0], [1], [0, 0, 1, 1], [], []>} : vector<16x16xbf16>, vector<16x32xbf16>, vector<16x32xf32> -> vector<16x32xf32>
    %22 = arith.addf %18, %21 : vector<16x32xf32>
    %23 = vector.extract_strided_slice %9 {offsets = [48, 0], sizes = [16, 16], strides = [1, 1]} : vector<400x16xbf16> to vector<16x16xbf16>
    %c48 = arith.constant 48 : index
    %c0_14 = arith.constant 0 : index
    %24 = vector.load %arg3[%c48, %c0_14] : memref<400x32xbf16, #tpu.memory_space<vmem>>, vector<16x32xbf16>
    %cst_15 = arith.constant dense<0.000000e+00> : vector<16x32xf32>
    %25 = tpu.matmul %23, %24, %cst_15 {dimension_numbers = #tpu.dot_dimension_numbers<[1], [0], [0], [1], [0, 0, 1, 1], [], []>} : vector<16x16xbf16>, vector<16x32xbf16>, vector<16x32xf32> -> vector<16x32xf32>
    %26 = arith.addf %22, %25 : vector<16x32xf32>
    %27 = vector.extract_strided_slice %9 {offsets = [64, 0], sizes = [16, 16], strides = [1, 1]} : vector<400x16xbf16> to vector<16x16xbf16>
    %c64 = arith.constant 64 : index
    %c0_16 = arith.constant 0 : index
    %28 = vector.load %arg3[%c64, %c0_16] : memref<400x32xbf16, #tpu.memory_space<vmem>>, vector<16x32xbf16>
    %cst_17 = arith.constant dense<0.000000e+00> : vector<16x32xf32>
    %29 = tpu.matmul %27, %28, %cst_17 {dimension_numbers = #tpu.dot_dimension_numbers<[1], [0], [0], [1], [0, 0, 1, 1], [], []>} : vector<16x16xbf16>, vector<16x32xbf16>, vector<16x32xf32> -> vector<16x32xf32>
    %30 = arith.addf %26, %29 : vector<16x32xf32>
    %31 = vector.extract_strided_slice %9 {offsets = [80, 0], sizes = [16, 16], strides = [1, 1]} : vector<400x16xbf16> to vector<16x16xbf16>
    %c80 = arith.constant 80 : index
    %c0_18 = arith.constant 0 : index
    %32 = vector.load %arg3[%c80, %c0_18] : memref<400x32xbf16, #tpu.memory_space<vmem>>, vector<16x32xbf16>
    %cst_19 = arith.constant dense<0.000000e+00> : vector<16x32xf32>
    %33 = tpu.matmul %31, %32, %cst_19 {dimension_numbers = #tpu.dot_dimension_numbers<[1], [0], [0], [1], [0, 0, 1, 1], [], []>} : vector<16x16xbf16>, vector<16x32xbf16>, vector<16x32xf32> -> vector<16x32xf32>
    %34 = arith.addf %30, %33 : vector<16x32xf32>
    %35 = vector.extract_strided_slice %9 {offsets = [96, 0], sizes = [16, 16], strides = [1, 1]} : vector<400x16xbf16> to vector<16x16xbf16>
    %c96 = arith.constant 96 : index
    %c0_20 = arith.constant 0 : index
    %36 = vector.load %arg3[%c96, %c0_20] : memref<400x32xbf16, #tpu.memory_space<vmem>>, vector<16x32xbf16>
    %cst_21 = arith.constant dense<0.000000e+00> : vector<16x32xf32>
    %37 = tpu.matmul %35, %36, %cst_21 {dimension_numbers = #tpu.dot_dimension_numbers<[1], [0], [0], [1], [0, 0, 1, 1], [], []>} : vector<16x16xbf16>, vector<16x32xbf16>, vector<16x32xf32> -> vector<16x32xf32>
    %38 = arith.addf %34, %37 : vector<16x32xf32>
    %39 = vector.extract_strided_slice %9 {offsets = [112, 0], sizes = [16, 16], strides = [1, 1]} : vector<400x16xbf16> to vector<16x16xbf16>
    %c112 = arith.constant 112 : index
    %c0_22 = arith.constant 0 : index
    %40 = vector.load %arg3[%c112, %c0_22] : memref<400x32xbf16, #tpu.memory_space<vmem>>, vector<16x32xbf16>
    %cst_23 = arith.constant dense<0.000000e+00> : vector<16x32xf32>
    %41 = tpu.matmul %39, %40, %cst_23 {dimension_numbers = #tpu.dot_dimension_numbers<[1], [0], [0], [1], [0, 0, 1, 1], [], []>} : vector<16x16xbf16>, vector<16x32xbf16>, vector<16x32xf32> -> vector<16x32xf32>
    %42 = arith.addf %38, %41 : vector<16x32xf32>
    %43 = vector.extract_strided_slice %9 {offsets = [128, 0], sizes = [16, 16], strides = [1, 1]} : vector<400x16xbf16> to vector<16x16xbf16>
    %c128 = arith.constant 128 : index
    %c0_24 = arith.constant 0 : index
    %44 = vector.load %arg3[%c128, %c0_24] : memref<400x32xbf16, #tpu.memory_space<vmem>>, vector<16x32xbf16>
    %cst_25 = arith.constant dense<0.000000e+00> : vector<16x32xf32>
    %45 = tpu.matmul %43, %44, %cst_25 {dimension_numbers = #tpu.dot_dimension_numbers<[1], [0], [0], [1], [0, 0, 1, 1], [], []>} : vector<16x16xbf16>, vector<16x32xbf16>, vector<16x32xf32> -> vector<16x32xf32>
    %46 = arith.addf %42, %45 : vector<16x32xf32>
    %47 = vector.extract_strided_slice %9 {offsets = [144, 0], sizes = [16, 16], strides = [1, 1]} : vector<400x16xbf16> to vector<16x16xbf16>
    %c144 = arith.constant 144 : index
    %c0_26 = arith.constant 0 : index
    %48 = vector.load %arg3[%c144, %c0_26] : memref<400x32xbf16, #tpu.memory_space<vmem>>, vector<16x32xbf16>
    %cst_27 = arith.constant dense<0.000000e+00> : vector<16x32xf32>
    %49 = tpu.matmul %47, %48, %cst_27 {dimension_numbers = #tpu.dot_dimension_numbers<[1], [0], [0], [1], [0, 0, 1, 1], [], []>} : vector<16x16xbf16>, vector<16x32xbf16>, vector<16x32xf32> -> vector<16x32xf32>
    %50 = arith.addf %46, %49 : vector<16x32xf32>
    %51 = vector.extract_strided_slice %9 {offsets = [160, 0], sizes = [16, 16], strides = [1, 1]} : vector<400x16xbf16> to vector<16x16xbf16>
    %c160 = arith.constant 160 : index
    %c0_28 = arith.constant 0 : index
    %52 = vector.load %arg3[%c160, %c0_28] : memref<400x32xbf16, #tpu.memory_space<vmem>>, vector<16x32xbf16>
    %cst_29 = arith.constant dense<0.000000e+00> : vector<16x32xf32>
    %53 = tpu.matmul %51, %52, %cst_29 {dimension_numbers = #tpu.dot_dimension_numbers<[1], [0], [0], [1], [0, 0, 1, 1], [], []>} : vector<16x16xbf16>, vector<16x32xbf16>, vector<16x32xf32> -> vector<16x32xf32>
    %54 = arith.addf %50, %53 : vector<16x32xf32>
    %55 = vector.extract_strided_slice %9 {offsets = [176, 0], sizes = [16, 16], strides = [1, 1]} : vector<400x16xbf16> to vector<16x16xbf16>
    %c176 = arith.constant 176 : index
    %c0_30 = arith.constant 0 : index
    %56 = vector.load %arg3[%c176, %c0_30] : memref<400x32xbf16, #tpu.memory_space<vmem>>, vector<16x32xbf16>
    %cst_31 = arith.constant dense<0.000000e+00> : vector<16x32xf32>
    %57 = tpu.matmul %55, %56, %cst_31 {dimension_numbers = #tpu.dot_dimension_numbers<[1], [0], [0], [1], [0, 0, 1, 1], [], []>} : vector<16x16xbf16>, vector<16x32xbf16>, vector<16x32xf32> -> vector<16x32xf32>
    %58 = arith.addf %54, %57 : vector<16x32xf32>
    %59 = vector.extract_strided_slice %9 {offsets = [192, 0], sizes = [16, 16], strides = [1, 1]} : vector<400x16xbf16> to vector<16x16xbf16>
    %c192 = arith.constant 192 : index
    %c0_32 = arith.constant 0 : index
    %60 = vector.load %arg3[%c192, %c0_32] : memref<400x32xbf16, #tpu.memory_space<vmem>>, vector<16x32xbf16>
    %cst_33 = arith.constant dense<0.000000e+00> : vector<16x32xf32>
    %61 = tpu.matmul %59, %60, %cst_33 {dimension_numbers = #tpu.dot_dimension_numbers<[1], [0], [0], [1], [0, 0, 1, 1], [], []>} : vector<16x16xbf16>, vector<16x32xbf16>, vector<16x32xf32> -> vector<16x32xf32>
    %62 = arith.addf %58, %61 : vector<16x32xf32>
    %63 = vector.extract_strided_slice %9 {offsets = [208, 0], sizes = [16, 16], strides = [1, 1]} : vector<400x16xbf16> to vector<16x16xbf16>
    %c208 = arith.constant 208 : index
    %c0_34 = arith.constant 0 : index
    %64 = vector.load %arg3[%c208, %c0_34] : memref<400x32xbf16, #tpu.memory_space<vmem>>, vector<16x32xbf16>
    %cst_35 = arith.constant dense<0.000000e+00> : vector<16x32xf32>
    %65 = tpu.matmul %63, %64, %cst_35 {dimension_numbers = #tpu.dot_dimension_numbers<[1], [0], [0], [1], [0, 0, 1, 1], [], []>} : vector<16x16xbf16>, vector<16x32xbf16>, vector<16x32xf32> -> vector<16x32xf32>
    %66 = arith.addf %62, %65 : vector<16x32xf32>
    %67 = vector.extract_strided_slice %9 {offsets = [224, 0], sizes = [16, 16], strides = [1, 1]} : vector<400x16xbf16> to vector<16x16xbf16>
    %c224 = arith.constant 224 : index
    %c0_36 = arith.constant 0 : index
    %68 = vector.load %arg3[%c224, %c0_36] : memref<400x32xbf16, #tpu.memory_space<vmem>>, vector<16x32xbf16>
    %cst_37 = arith.constant dense<0.000000e+00> : vector<16x32xf32>
    %69 = tpu.matmul %67, %68, %cst_37 {dimension_numbers = #tpu.dot_dimension_numbers<[1], [0], [0], [1], [0, 0, 1, 1], [], []>} : vector<16x16xbf16>, vector<16x32xbf16>, vector<16x32xf32> -> vector<16x32xf32>
    %70 = arith.addf %66, %69 : vector<16x32xf32>
    %71 = vector.extract_strided_slice %9 {offsets = [240, 0], sizes = [16, 16], strides = [1, 1]} : vector<400x16xbf16> to vector<16x16xbf16>
    %c240 = arith.constant 240 : index
    %c0_38 = arith.constant 0 : index
    %72 = vector.load %arg3[%c240, %c0_38] : memref<400x32xbf16, #tpu.memory_space<vmem>>, vector<16x32xbf16>
    %cst_39 = arith.constant dense<0.000000e+00> : vector<16x32xf32>
    %73 = tpu.matmul %71, %72, %cst_39 {dimension_numbers = #tpu.dot_dimension_numbers<[1], [0], [0], [1], [0, 0, 1, 1], [], []>} : vector<16x16xbf16>, vector<16x32xbf16>, vector<16x32xf32> -> vector<16x32xf32>
    %74 = arith.addf %70, %73 : vector<16x32xf32>
    %75 = vector.extract_strided_slice %9 {offsets = [256, 0], sizes = [16, 16], strides = [1, 1]} : vector<400x16xbf16> to vector<16x16xbf16>
    %c256 = arith.constant 256 : index
    %c0_40 = arith.constant 0 : index
    %76 = vector.load %arg3[%c256, %c0_40] : memref<400x32xbf16, #tpu.memory_space<vmem>>, vector<16x32xbf16>
    %cst_41 = arith.constant dense<0.000000e+00> : vector<16x32xf32>
    %77 = tpu.matmul %75, %76, %cst_41 {dimension_numbers = #tpu.dot_dimension_numbers<[1], [0], [0], [1], [0, 0, 1, 1], [], []>} : vector<16x16xbf16>, vector<16x32xbf16>, vector<16x32xf32> -> vector<16x32xf32>
    %78 = arith.addf %74, %77 : vector<16x32xf32>
    %79 = vector.extract_strided_slice %9 {offsets = [272, 0], sizes = [16, 16], strides = [1, 1]} : vector<400x16xbf16> to vector<16x16xbf16>
    %c272 = arith.constant 272 : index
    %c0_42 = arith.constant 0 : index
    %80 = vector.load %arg3[%c272, %c0_42] : memref<400x32xbf16, #tpu.memory_space<vmem>>, vector<16x32xbf16>
    %cst_43 = arith.constant dense<0.000000e+00> : vector<16x32xf32>
    %81 = tpu.matmul %79, %80, %cst_43 {dimension_numbers = #tpu.dot_dimension_numbers<[1], [0], [0], [1], [0, 0, 1, 1], [], []>} : vector<16x16xbf16>, vector<16x32xbf16>, vector<16x32xf32> -> vector<16x32xf32>
    %82 = arith.addf %78, %81 : vector<16x32xf32>
    %83 = vector.extract_strided_slice %9 {offsets = [288, 0], sizes = [16, 16], strides = [1, 1]} : vector<400x16xbf16> to vector<16x16xbf16>
    %c288 = arith.constant 288 : index
    %c0_44 = arith.constant 0 : index
    %84 = vector.load %arg3[%c288, %c0_44] : memref<400x32xbf16, #tpu.memory_space<vmem>>, vector<16x32xbf16>
    %cst_45 = arith.constant dense<0.000000e+00> : vector<16x32xf32>
    %85 = tpu.matmul %83, %84, %cst_45 {dimension_numbers = #tpu.dot_dimension_numbers<[1], [0], [0], [1], [0, 0, 1, 1], [], []>} : vector<16x16xbf16>, vector<16x32xbf16>, vector<16x32xf32> -> vector<16x32xf32>
    %86 = arith.addf %82, %85 : vector<16x32xf32>
    %87 = vector.extract_strided_slice %9 {offsets = [304, 0], sizes = [16, 16], strides = [1, 1]} : vector<400x16xbf16> to vector<16x16xbf16>
    %c304 = arith.constant 304 : index
    %c0_46 = arith.constant 0 : index
    %88 = vector.load %arg3[%c304, %c0_46] : memref<400x32xbf16, #tpu.memory_space<vmem>>, vector<16x32xbf16>
    %cst_47 = arith.constant dense<0.000000e+00> : vector<16x32xf32>
    %89 = tpu.matmul %87, %88, %cst_47 {dimension_numbers = #tpu.dot_dimension_numbers<[1], [0], [0], [1], [0, 0, 1, 1], [], []>} : vector<16x16xbf16>, vector<16x32xbf16>, vector<16x32xf32> -> vector<16x32xf32>
    %90 = arith.addf %86, %89 : vector<16x32xf32>
    %91 = vector.extract_strided_slice %9 {offsets = [320, 0], sizes = [16, 16], strides = [1, 1]} : vector<400x16xbf16> to vector<16x16xbf16>
    %c320 = arith.constant 320 : index
    %c0_48 = arith.constant 0 : index
    %92 = vector.load %arg3[%c320, %c0_48] : memref<400x32xbf16, #tpu.memory_space<vmem>>, vector<16x32xbf16>
    %cst_49 = arith.constant dense<0.000000e+00> : vector<16x32xf32>
    %93 = tpu.matmul %91, %92, %cst_49 {dimension_numbers = #tpu.dot_dimension_numbers<[1], [0], [0], [1], [0, 0, 1, 1], [], []>} : vector<16x16xbf16>, vector<16x32xbf16>, vector<16x32xf32> -> vector<16x32xf32>
    %94 = arith.addf %90, %93 : vector<16x32xf32>
    %95 = vector.extract_strided_slice %9 {offsets = [336, 0], sizes = [16, 16], strides = [1, 1]} : vector<400x16xbf16> to vector<16x16xbf16>
    %c336 = arith.constant 336 : index
    %c0_50 = arith.constant 0 : index
    %96 = vector.load %arg3[%c336, %c0_50] : memref<400x32xbf16, #tpu.memory_space<vmem>>, vector<16x32xbf16>
    %cst_51 = arith.constant dense<0.000000e+00> : vector<16x32xf32>
    %97 = tpu.matmul %95, %96, %cst_51 {dimension_numbers = #tpu.dot_dimension_numbers<[1], [0], [0], [1], [0, 0, 1, 1], [], []>} : vector<16x16xbf16>, vector<16x32xbf16>, vector<16x32xf32> -> vector<16x32xf32>
    %98 = arith.addf %94, %97 : vector<16x32xf32>
    %99 = vector.extract_strided_slice %9 {offsets = [352, 0], sizes = [16, 16], strides = [1, 1]} : vector<400x16xbf16> to vector<16x16xbf16>
    %c352 = arith.constant 352 : index
    %c0_52 = arith.constant 0 : index
    %100 = vector.load %arg3[%c352, %c0_52] : memref<400x32xbf16, #tpu.memory_space<vmem>>, vector<16x32xbf16>
    %cst_53 = arith.constant dense<0.000000e+00> : vector<16x32xf32>
    %101 = tpu.matmul %99, %100, %cst_53 {dimension_numbers = #tpu.dot_dimension_numbers<[1], [0], [0], [1], [0, 0, 1, 1], [], []>} : vector<16x16xbf16>, vector<16x32xbf16>, vector<16x32xf32> -> vector<16x32xf32>
    %102 = arith.addf %98, %101 : vector<16x32xf32>
    %103 = vector.extract_strided_slice %9 {offsets = [368, 0], sizes = [16, 16], strides = [1, 1]} : vector<400x16xbf16> to vector<16x16xbf16>
    %c368 = arith.constant 368 : index
    %c0_54 = arith.constant 0 : index
    %104 = vector.load %arg3[%c368, %c0_54] : memref<400x32xbf16, #tpu.memory_space<vmem>>, vector<16x32xbf16>
    %cst_55 = arith.constant dense<0.000000e+00> : vector<16x32xf32>
    %105 = tpu.matmul %103, %104, %cst_55 {dimension_numbers = #tpu.dot_dimension_numbers<[1], [0], [0], [1], [0, 0, 1, 1], [], []>} : vector<16x16xbf16>, vector<16x32xbf16>, vector<16x32xf32> -> vector<16x32xf32>
    %106 = arith.addf %102, %105 : vector<16x32xf32>
    %107 = vector.extract_strided_slice %9 {offsets = [384, 0], sizes = [16, 16], strides = [1, 1]} : vector<400x16xbf16> to vector<16x16xbf16>
    %c384 = arith.constant 384 : index
    %c0_56 = arith.constant 0 : index
    %108 = vector.load %arg3[%c384, %c0_56] : memref<400x32xbf16, #tpu.memory_space<vmem>>, vector<16x32xbf16>
    %cst_57 = arith.constant dense<0.000000e+00> : vector<16x32xf32>
    %109 = tpu.matmul %107, %108, %cst_57 {dimension_numbers = #tpu.dot_dimension_numbers<[1], [0], [0], [1], [0, 0, 1, 1], [], []>} : vector<16x16xbf16>, vector<16x32xbf16>, vector<16x32xf32> -> vector<16x32xf32>
    %110 = arith.addf %106, %109 : vector<16x32xf32>
    %cst_58 = arith.constant 0.000000e+00 : f32
    %111 = vector.broadcast %cst_58 : f32 to vector<16x32xf32>
    %112 = arith.cmpf oge, %110, %111 : vector<16x32xf32>
    %cst_59 = arith.constant 3.000000e-01 : f32
    %113 = vector.broadcast %cst_59 : f32 to vector<16x32xf32>
    %114 = arith.mulf %113, %110 : vector<16x32xf32>
    %115 = arith.select %112, %110, %114 : vector<16x32xi1>, vector<16x32xf32>
    %c0_60 = arith.constant 0 : index
    %c0_61 = arith.constant 0 : index
    %116 = vector.load %arg4[%c0_60, %c0_61] : memref<16x32xf32, #tpu.memory_space<vmem>>, vector<16x32xf32>
    %117 = arith.mulf %115, %116 : vector<16x32xf32>
    %cst_62 = arith.constant dense<0.000000e+00> : vector<16xf32>
    %118 = vector.multi_reduction <add>, %117, %cst_62 [1] : vector<16x32xf32> to vector<16xf32>
    %119 = vector.shape_cast %118 : vector<16xf32> to vector<16x1xf32>
    %cst_63 = arith.constant dense<0.000000e+00> : vector<1xf32>
    %120 = vector.multi_reduction <add>, %119, %cst_63 [0] : vector<16x1xf32> to vector<1xf32>
    %121 = vector.shape_cast %120 : vector<1xf32> to vector<1x1xf32>
    %122 = vector.shape_cast %121 : vector<1x1xf32> to vector<1x1x1xf32>
    %123 = vector.shape_cast %122 : vector<1x1x1xf32> to vector<1x1x1xf32>
    %124 = vector.broadcast %123 : vector<1x1x1xf32> to vector<1x1x128xf32>
    %c0_64 = arith.constant 0 : index
    %c0_65 = arith.constant 0 : index
    %c0_66 = arith.constant 0 : index
    %125 = vector.load %arg5[%c0_64, %c0_65, %c0_66] : memref<1x1x128xf32, #tpu.memory_space<vmem>>, vector<1x1x128xf32>
    tpu.vector_store %arg5[%c0_64, %c0_65, %c0_66], %124 {strides = array<i32>} : memref<1x1x128xf32, #tpu.memory_space<vmem>>, vector<1x1x128xf32>,
    return
  }
  func.func @transform_0(%arg0: i32) -> (i32, i32, i32) {
    %c0_i32 = arith.constant 0 : i32
    %c0_i32_0 = arith.constant 0 : i32
    %c0_i32_1 = arith.constant 0 : i32
    return %arg0, %c0_i32, %c0_i32_0 : i32, i32, i32
  }
  func.func @transform_1(%arg0: i32) -> (i32, i32) {
    %c0_i32 = arith.constant 0 : i32
    %c0_i32_0 = arith.constant 0 : i32
    %c0_i32_1 = arith.constant 0 : i32
    return %c0_i32, %c0_i32_0 : i32, i32
  }
  func.func @transform_2(%arg0: i32) -> (i32, i32) {
    %c0_i32 = arith.constant 0 : i32
    %c0_i32_0 = arith.constant 0 : i32
    %c0_i32_1 = arith.constant 0 : i32
    return %c0_i32, %c0_i32_0 : i32, i32
  }
  func.func @transform_3(%arg0: i32) -> (i32, i32) {
    %c0_i32 = arith.constant 0 : i32
    %c0_i32_0 = arith.constant 0 : i32
    %c0_i32_1 = arith.constant 0 : i32
    return %c0_i32, %c0_i32_0 : i32, i32
  }
  func.func @transform_4(%arg0: i32) -> (i32, i32, i32) {
    %c0_i32 = arith.constant 0 : i32
    %c0_i32_0 = arith.constant 0 : i32
    %c0_i32_1 = arith.constant 0 : i32
    return %arg0, %c0_i32, %c0_i32_0 : i32, i32, i32
  }
}

</mosaic_0001>

<llo_original>
// kernel: discriminator_forward.1
$region0: #{discriminator_forward.1}
  #allocation0 [shape = 'u32[]', space=smem, size = 0x4, offset = 0x4, fixed_abs, tag = 'smem constant byte address 0x4 - core index']
  #allocation1 [shape = 'u32[144,128]{1,0:T(1,128)}', space=vmem, size = 0x12000, scoped, tag = 'internal scratch']
  %s0 = inlined_call_operand.vmem [shape: bf16[2,400,128], index: 0, kind: input, shape index: {}]
  %s1 = inlined_call_operand.vmem [shape: bf16[128,16], index: 1, kind: input, shape index: {}]
  %s2 = inlined_call_operand.vmem [shape: bf16[400,32], index: 2, kind: input, shape index: {}]
  %s3 = inlined_call_operand.vmem [shape: f32[16,32], index: 3, kind: input, shape index: {}]
  %s4 = inlined_call_operand.vmem [shape: f32[2,1,128], index: 4, kind: output, shape index: {}]
  %s5 = sld [smem:[#allocation0]]
  $region49: #{discriminator_forward.1} parent=0
    _
  %s7 = ssub.s32 1, %s5
  %s8 = scalar_select 0, %s7, %s5
  loop: start=0, step=1, limit=4
  $region2: #{discriminator_forward.1} parent=0 // loop_pre_header
    _
  $region3: #{discriminator_forward.1} parent=0 // loop_header
    %s10 = sphi 0, %s14
    %p11 = scmp.ge.s32.totalorder %s10, 4
    %s20 = sphi 0, %s22
    %s23 = sphi 0, %s20
    %s24 = sphi 0, %s23
    %s40 = sphi 0, %s24
    %s44 = sphi 0, %s44
    %s46 = sphi 0, %s44
    %s47 = sphi 0, %s46
    %s61 = sphi 0, %s47
    %s65 = sphi 0, %s65
    %s67 = sphi 0, %s65
    %s68 = sphi 0, %s67
    %s82 = sphi 0, %s68
    %s86 = sphi 0, %s86
    %s88 = sphi 0, %s86
    %s89 = sphi 0, %s88
    %s103 = sphi 0, %s89
    %s109 = sphi 0, %s111
    %s112 = sphi 0, %s109
    %s113 = sphi 0, %s112
    %s129 = sphi 0, %s113
  $region4: #{discriminator_forward.1} parent=0 // loop_header_branch
    %13 = sbr.rel (%p11) target = $region8
  $region5: #{discriminator_forward.1} parent=0 // loop_body
    %s15 = ssub.s32 %s10, 1
    %s16 = ssub.s32 %s10, 2
    %s17 = sadd.s32 %s10, 1
    %s18 = ssub.s32 %s10, %s17
    %p19 = scmp.eq.s32.totalorder %s18, 0
    %s21 = sadd.s32 %s20, 1
    %s22 = scalar_select %p19, %s20, %s21
    %p25 = pneg %p19
    %p26 = scmp.eq.s32.totalorder %s10, 1
    %p27 = por %p25, %p26
    %p28 = scmp.ne.s32.totalorder %s20, %s23
    %p29 = scmp.eq.s32.totalorder %s10, 0
    %p30 = por %p28, %p29
    %p31 = scmp.ne.s32.totalorder %s20, %s23
    %p32 = scmp.eq.s32.totalorder %s15, 1
    %p33 = por %p31, %p32
    %p34 = scmp.ne.s32.totalorder %s23, %s24
    %p35 = scmp.eq.s32.totalorder %s15, 0
    %p36 = por %p34, %p35
    %p37 = scmp.ne.s32.totalorder %s23, %s24
    %p38 = scmp.eq.s32.totalorder %s16, 1
    %p39 = por %p37, %p38
    %p41 = scmp.ne.s32.totalorder %s24, %s40
    %p42 = scmp.eq.s32.totalorder %s16, 0
    %p43 = por %p41, %p42
    %s45 = sadd.s32 %s44, 1
    %p48 = scmp.eq.s32.totalorder %s10, 1
    %p49 = scmp.ne.s32.totalorder %s44, %s46
    %p50 = scmp.eq.s32.totalorder %s10, 0
    %p51 = por %p49, %p50
    %p52 = scmp.ne.s32.totalorder %s44, %s46
    %p53 = scmp.eq.s32.totalorder %s15, 1
    %p54 = por %p52, %p53
    %p55 = scmp.ne.s32.totalorder %s46, %s47
    %p56 = scmp.eq.s32.totalorder %s15, 0
    %p57 = por %p55, %p56
    %p58 = scmp.ne.s32.totalorder %s46, %s47
    %p59 = scmp.eq.s32.totalorder %s16, 1
    %p60 = por %p58, %p59
    %p62 = scmp.ne.s32.totalorder %s47, %s61
    %p63 = scmp.eq.s32.totalorder %s16, 0
    %p64 = por %p62, %p63
    %s66 = sadd.s32 %s65, 1
    %p69 = scmp.eq.s32.totalorder %s10, 1
    %p70 = scmp.ne.s32.totalorder %s65, %s67
    %p71 = scmp.eq.s32.totalorder %s10, 0
    %p72 = por %p70, %p71
    %p73 = scmp.ne.s32.totalorder %s65, %s67
    %p74 = scmp.eq.s32.totalorder %s15, 1
    %p75 = por %p73, %p74
    %p76 = scmp.ne.s32.totalorder %s67, %s68
    %p77 = scmp.eq.s32.totalorder %s15, 0
    %p78 = por %p76, %p77
    %p79 = scmp.ne.s32.totalorder %s67, %s68
    %p80 = scmp.eq.s32.totalorder %s16, 1
    %p81 = por %p79, %p80
    %p83 = scmp.ne.s32.totalorder %s68, %s82
    %p84 = scmp.eq.s32.totalorder %s16, 0
    %p85 = por %p83, %p84
    %s87 = sadd.s32 %s86, 1
    %p90 = scmp.eq.s32.totalorder %s10, 1
    %p91 = scmp.ne.s32.totalorder %s86, %s88
    %p92 = scmp.eq.s32.totalorder %s10, 0
    %p93 = por %p91, %p92
    %p94 = scmp.ne.s32.totalorder %s86, %s88
    %p95 = scmp.eq.s32.totalorder %s15, 1
    %p96 = por %p94, %p95
    %p97 = scmp.ne.s32.totalorder %s88, %s89
    %p98 = scmp.eq.s32.totalorder %s15, 0
    %p99 = por %p97, %p98
    %p100 = scmp.ne.s32.totalorder %s88, %s89
    %p101 = scmp.eq.s32.totalorder %s16, 1
    %p102 = por %p100, %p101
    %p104 = scmp.ne.s32.totalorder %s89, %s103
    %p105 = scmp.eq.s32.totalorder %s16, 0
    %p106 = por %p104, %p105
    %s107 = ssub.s32 %s10, %s17
    %p108 = scmp.eq.s32.totalorder %s107, 0
    %s110 = sadd.s32 %s109, 1
    %s111 = scalar_select %p108, %s109, %s110
    %p114 = pneg %p108
    %p115 = scmp.eq.s32.totalorder %s10, 1
    %p116 = por %p114, %p115
    %p117 = scmp.ne.s32.totalorder %s109, %s112
    %p118 = scmp.eq.s32.totalorder %s10, 0
    %p119 = por %p117, %p118
    %p120 = scmp.ne.s32.totalorder %s109, %s112
    %p121 = scmp.eq.s32.totalorder %s15, 1
    %p122 = por %p120, %p121
    %p123 = scmp.ne.s32.totalorder %s112, %s113
    %p124 = scmp.eq.s32.totalorder %s15, 0
    %p125 = por %p123, %p124
    %p126 = scmp.ne.s32.totalorder %s112, %s113
    %p127 = scmp.eq.s32.totalorder %s16, 1
    %p128 = por %p126, %p127
    %p130 = scmp.ne.s32.totalorder %s113, %s129
    %p131 = scmp.eq.s32.totalorder %s16, 0
    %p132 = por %p130, %p131
    %p133 = scmp.le.s32.totalorder 1, %s10
    %p134 = scmp.lt.s32.totalorder %s10, 3
    %p135 = pnand %p133, %p134
    %p136 = pneg %p135
    // Predicated region
    $region9: #{discriminator_forward.1} parent=5 // pred_check
      _
    $region10: #{discriminator_forward.1} parent=5 // pred_check_branch
      %138 = sbr.rel (%p135) target = $region12
    $region11: #{discriminator_forward.1} parent=5 // pred_region
      %s139 = ssub.s32 %s10, 1
      // Predicated region
      $region13: #{discriminator_forward.1} parent=11 // pred_check
        %p140 = pneg %p57
      $region14: #{discriminator_forward.1} parent=11 // pred_check_branch
        %142 = sbr.rel (%p140) target = $region16
      $region15: #{discriminator_forward.1} parent=11 // pred_region
        _
      $region16: #{discriminator_forward.1} parent=11 // pred_fallthru
        _
      // Predicated region
      $region17: #{discriminator_forward.1} parent=11 // pred_check
        %p143 = pneg %p78
      $region18: #{discriminator_forward.1} parent=11 // pred_check_branch
        %145 = sbr.rel (%p143) target = $region20
      $region19: #{discriminator_forward.1} parent=11 // pred_region
        _
      $region20: #{discriminator_forward.1} parent=11 // pred_fallthru
        _
      // Predicated region
      $region21: #{discriminator_forward.1} parent=11 // pred_check
        %p146 = pneg %p99
      $region22: #{discriminator_forward.1} parent=11 // pred_check_branch
        %148 = sbr.rel (%p146) target = $region24
      $region23: #{discriminator_forward.1} parent=11 // pred_region
        _
      $region24: #{discriminator_forward.1} parent=11 // pred_fallthru
        _
    $region12: #{discriminator_forward.1} parent=5 // pred_fallthru
      _
    %p149 = scmp.lt.s32.totalorder %s10, 2
    // Predicated region
    $region25: #{discriminator_forward.1} parent=5 // pred_check
      %p150 = pneg %p149
    $region26: #{discriminator_forward.1} parent=5 // pred_check_branch
      %152 = sbr.rel (%p150) target = $region28
    $region27: #{discriminator_forward.1} parent=5 // pred_region
      // Predicated region
      $region29: #{discriminator_forward.1} parent=27 // pred_check
        %p153 = pneg %p30
      $region30: #{discriminator_forward.1} parent=27 // pred_check_branch
        %155 = sbr.rel (%p153) target = $region32
      $region31: #{discriminator_forward.1} parent=27 // pred_region
        %p156 = scmp.lt.s32.totalorder %s10, 1
        %s157 = scalar_select %p156, %s10, 1
        %s158 = smul.addr %s157, 50
        %s159 = smul.addr %s158, 4
        %s160 = scalar_lea.vmem %s0, %s159
      $region32: #{discriminator_forward.1} parent=27 // pred_fallthru
        _
    $region28: #{discriminator_forward.1} parent=5 // pred_fallthru
      _
    %p161 = scmp.le.s32.totalorder 1, %s10
    %p162 = scmp.lt.s32.totalorder %s10, 3
    %p163 = pnand %p161, %p162
    %p164 = pneg %p163
    // Predicated region
    $region33: #{discriminator_forward.1} parent=5 // pred_check
      _
    $region34: #{discriminator_forward.1} parent=5 // pred_check_branch
      %166 = sbr.rel (%p163) target = $region36
    $region35: #{discriminator_forward.1} parent=5 // pred_region
      %s167 = ssub.s32 %s10, 1
      %p168 = scmp.lt.s32.totalorder %s15, 1
      %s169 = scalar_select %p168, %s15, 1
      %s170 = smul.addr %s169, 50
      %s171 = smul.addr %s170, 4
      %s172 = scalar_lea.vmem %s0, %s171
      %p173 = pneg %p36
      %p174 = pneg %p33
      %p175 = pneg %p57
      %p176 = pneg %p54
      %p177 = pneg %p78
      %p178 = pneg %p75
      %p179 = pneg %p99
      %p180 = pneg %p96
      %p181 = pneg %p125
      %p182 = pneg %p122
      %p183 = scmp.lt.s32.totalorder %s15, 1
      %s184 = scalar_select %p183, %s15, 1
      %s185 = scalar_lea.vmem %s4, %s184
      %p186 = scmp.lt.s32.totalorder %s15, 1
      %s187 = scalar_select %p186, %s15, 1
      %s188 = smul.addr %s187, 50
      %s189 = smul.addr %s188, 4
      %s190 = scalar_lea.vmem %s0, %s189
      %p191 = scmp.lt.s32.totalorder %s15, 1
      %s192 = scalar_select %p191, %s15, 1
      %s193 = scalar_lea.vmem %s4, %s192
      %v195 = vld [vmem:[%s190] sm:$0xf]
      %v196 = vld [vmem:[%s190 + $0x4] sm:$0xf]
      %v197 = vld [vmem:[%s190 + $0x8] sm:$0xf]
      %v198 = vld [vmem:[%s190 + $0xc] sm:$0xf]
      %v199 = vld [vmem:[%s190 + $0x10] sm:$0xf]
      %v200 = vld [vmem:[%s190 + $0x14] sm:$0xf]
      %v201 = vld [vmem:[%s190 + $0x18] sm:$0xf]
      %v202 = vld [vmem:[%s190 + $0x1c] sm:$0xf]
      %v203 = vld [vmem:[%s190 + $0x20] sm:$0xf]
      %v204 = vld [vmem:[%s190 + $0x24] sm:$0xf]
      %v205 = vld [vmem:[%s190 + $0x28] sm:$0xf]
      %v206 = vld [vmem:[%s190 + $0x2c] sm:$0xf]
      %v207 = vld [vmem:[%s190 + $0x30] sm:$0xf]
      %v208 = vld [vmem:[%s190 + $0x34] sm:$0xf]
      %v209 = vld [vmem:[%s190 + $0x38] sm:$0xf]
      %v210 = vld [vmem:[%s190 + $0x3c] sm:$0xf]
      %v211 = vld [vmem:[%s190 + $0x40] sm:$0xf]
      %v212 = vld [vmem:[%s190 + $0x44] sm:$0xf]
      %v213 = vld [vmem:[%s190 + $0x48] sm:$0xf]
      %v214 = vld [vmem:[%s190 + $0x4c] sm:$0xf]
      %v215 = vld [vmem:[%s190 + $0x50] sm:$0xf]
      %v216 = vld [vmem:[%s190 + $0x54] sm:$0xf]
      %v217 = vld [vmem:[%s190 + $0x58] sm:$0xf]
      %v218 = vld [vmem:[%s190 + $0x5c] sm:$0xf]
      %v219 = vld [vmem:[%s190 + $0x60] sm:$0xf]
      %v220 = vld [vmem:[%s190 + $0x64] sm:$0xf]
      %v221 = vld [vmem:[%s190 + $0x68] sm:$0xf]
      %v222 = vld [vmem:[%s190 + $0x6c] sm:$0xf]
      %v223 = vld [vmem:[%s190 + $0x70] sm:$0xf]
      %v224 = vld [vmem:[%s190 + $0x74] sm:$0xf]
      %v225 = vld [vmem:[%s190 + $0x78] sm:$0xf]
      %v226 = vld [vmem:[%s190 + $0x7c] sm:$0xf]
      %v227 = vld [vmem:[%s190 + $0x80] sm:$0xf]
      %v228 = vld [vmem:[%s190 + $0x84] sm:$0xf]
      %v229 = vld [vmem:[%s190 + $0x88] sm:$0xf]
      %v230 = vld [vmem:[%s190 + $0x8c] sm:$0xf]
      %v231 = vld [vmem:[%s190 + $0x90] sm:$0xf]
      %v232 = vld [vmem:[%s190 + $0x94] sm:$0xf]
      %v233 = vld [vmem:[%s190 + $0x98] sm:$0xf]
      %v234 = vld [vmem:[%s190 + $0x9c] sm:$0xf]
      %v235 = vld [vmem:[%s190 + $0xa0] sm:$0xf]
      %v236 = vld [vmem:[%s190 + $0xa4] sm:$0xf]
      %v237 = vld [vmem:[%s190 + $0xa8] sm:$0xf]
      %v238 = vld [vmem:[%s190 + $0xac] sm:$0xf]
      %v239 = vld [vmem:[%s190 + $0xb0] sm:$0xf]
      %v240 = vld [vmem:[%s190 + $0xb4] sm:$0xf]
      %v241 = vld [vmem:[%s190 + $0xb8] sm:$0xf]
      %v242 = vld [vmem:[%s190 + $0xbc] sm:$0xf]
      %v243 = vld [vmem:[%s190 + $0xc0] sm:$0xf]
      %v244 = vld [vmem:[%s190 + $0xc4] sm:$0xf]
      %v245 = vld [vmem:[%s1] sm:$0xf]
      %v246 = vld [vmem:[%s1 + $0x4] sm:$0xf]
      %v247 = vld [vmem:[%s1 + $0x8] sm:$0xf]
      %v248 = vld [vmem:[%s1 + $0xc] sm:$0xf]
      %v249 = vld [vmem:[%s1 + $0x10] sm:$0xf]
      %v250 = vld [vmem:[%s1 + $0x14] sm:$0xf]
      %v251 = vld [vmem:[%s1 + $0x18] sm:$0xf]
      %v252 = vld [vmem:[%s1 + $0x1c] sm:$0xf]
      %v253 = vld [vmem:[%s1 + $0x20] sm:$0xf]
      %v254 = vld [vmem:[%s1 + $0x24] sm:$0xf]
      %v255 = vld [vmem:[%s1 + $0x28] sm:$0xf]
      %v256 = vld [vmem:[%s1 + $0x2c] sm:$0xf]
      %v257 = vld [vmem:[%s1 + $0x30] sm:$0xf]
      %v258 = vld [vmem:[%s1 + $0x34] sm:$0xf]
      %v259 = vld [vmem:[%s1 + $0x38] sm:$0xf]
      %v260 = vld [vmem:[%s1 + $0x3c] sm:$0xf]
      %v311 = vunpack.c.l.b16 %v195
      %v312 = vunpack.c.l.b16 %v196
      %v313 = vunpack.c.l.b16 %v197
      %v314 = vunpack.c.l.b16 %v198
      %v315 = vunpack.c.l.b16 %v199
      %v316 = vunpack.c.l.b16 %v200
      %v317 = vunpack.c.l.b16 %v201
      %v318 = vunpack.c.l.b16 %v202
      %v319 = vunpack.c.l.b16 %v203
      %v320 = vunpack.c.l.b16 %v204
      %v321 = vunpack.c.l.b16 %v205
      %v322 = vunpack.c.l.b16 %v206
      %v323 = vunpack.c.l.b16 %v207
      %v324 = vunpack.c.l.b16 %v208
      %v325 = vunpack.c.l.b16 %v209
      %v326 = vunpack.c.l.b16 %v210
      %v327 = vunpack.c.l.b16 %v211
      %v328 = vunpack.c.l.b16 %v212
      %v329 = vunpack.c.l.b16 %v213
      %v330 = vunpack.c.l.b16 %v214
      %v331 = vunpack.c.l.b16 %v215
      %v332 = vunpack.c.l.b16 %v216
      %v333 = vunpack.c.l.b16 %v217
      %v334 = vunpack.c.l.b16 %v218
      %v335 = vunpack.c.l.b16 %v219
      %v336 = vunpack.c.l.b16 %v220
      %v337 = vunpack.c.l.b16 %v221
      %v338 = vunpack.c.l.b16 %v222
      %v339 = vunpack.c.l.b16 %v223
      %v340 = vunpack.c.l.b16 %v224
      %v341 = vunpack.c.l.b16 %v225
      %v342 = vunpack.c.l.b16 %v226
      %v343 = vunpack.c.l.b16 %v227
      %v344 = vunpack.c.l.b16 %v228
      %v345 = vunpack.c.l.b16 %v229
      %v346 = vunpack.c.l.b16 %v230
      %v347 = vunpack.c.l.b16 %v231
      %v348 = vunpack.c.l.b16 %v232
      %v349 = vunpack.c.l.b16 %v233
      %v350 = vunpack.c.l.b16 %v234
      %v351 = vunpack.c.l.b16 %v235
      %v352 = vunpack.c.l.b16 %v236
      %v353 = vunpack.c.l.b16 %v237
      %v354 = vunpack.c.l.b16 %v238
      %v355 = vunpack.c.l.b16 %v239
      %v356 = vunpack.c.l.b16 %v240
      %v357 = vunpack.c.l.b16 %v241
      %v358 = vunpack.c.l.b16 %v242
      %v359 = vunpack.c.l.b16 %v243
      %v360 = vunpack.c.l.b16 %v244
      %v361 = vpack.c.b16 %v312, %v311
      %v362 = vpack.c.b16 %v314, %v313
      %v363 = vpack.c.b16 %v316, %v315
      %v364 = vpack.c.b16 %v318, %v317
      %v365 = vpack.c.b16 %v320, %v319
      %v366 = vpack.c.b16 %v322, %v321
      %v367 = vpack.c.b16 %v324, %v323
      %v368 = vpack.c.b16 %v326, %v325
      %v369 = vpack.c.b16 %v328, %v327
      %v370 = vpack.c.b16 %v330, %v329
      %v371 = vpack.c.b16 %v332, %v331
      %v372 = vpack.c.b16 %v334, %v333
      %v373 = vpack.c.b16 %v336, %v335
      %v374 = vpack.c.b16 %v338, %v337
      %v375 = vpack.c.b16 %v340, %v339
      %v376 = vpack.c.b16 %v342, %v341
      %v377 = vpack.c.b16 %v344, %v343
      %v378 = vpack.c.b16 %v346, %v345
      %v379 = vpack.c.b16 %v348, %v347
      %v380 = vpack.c.b16 %v350, %v349
      %v381 = vpack.c.b16 %v352, %v351
      %v382 = vpack.c.b16 %v354, %v353
      %v383 = vpack.c.b16 %v356, %v355
      %v384 = vpack.c.b16 %v358, %v357
      %v385 = vpack.c.b16 %v360, %v359
      %v427 = vunpack.c.l.b16 %v245
      %v428 = vunpack.c.l.b16 %v246
      %v429 = vunpack.c.l.b16 %v247
      %v430 = vunpack.c.l.b16 %v248
      %v431 = vunpack.c.l.b16 %v249
      %v432 = vunpack.c.l.b16 %v250
      %v433 = vunpack.c.l.b16 %v251
      %v434 = vunpack.c.l.b16 %v252
      %v435 = vunpack.c.l.b16 %v253
      %v436 = vunpack.c.l.b16 %v254
      %v437 = vunpack.c.l.b16 %v255
      %v438 = vunpack.c.l.b16 %v256
      %v439 = vunpack.c.l.b16 %v257
      %v440 = vunpack.c.l.b16 %v258
      %v441 = vunpack.c.l.b16 %v259
      %v442 = vunpack.c.l.b16 %v260
      %v443 = vpack.c.b16 %v428, %v427
      %v444 = vpack.c.b16 %v430, %v429
      %v445 = vpack.c.b16 %v432, %v431
      %v446 = vpack.c.b16 %v434, %v433
      %v447 = vpack.c.b16 %v436, %v435
      %v448 = vpack.c.b16 %v438, %v437
      %v449 = vpack.c.b16 %v440, %v439
      %v450 = vpack.c.b16 %v442, %v441
      %459 = vmatprep.subr.bf16.mxu0 0
      %460 = vmatpush1.bf16.msra.mxu0 %v443
      %461 = vmatprep.subr.bf16.mxu0 0
      %462 = vmatpush1.bf16.msra.mxu0 %v444
      %463 = vmatprep.subr.bf16.mxu0 0
      %464 = vmatpush1.bf16.msra.mxu0 %v445
      %465 = vmatprep.subr.bf16.mxu0 0
      %466 = vmatpush1.bf16.msra.mxu0 %v446
      %467 = vmatprep.subr.bf16.mxu0 0
      %468 = vmatpush1.bf16.msra.mxu0 %v447
      %469 = vmatprep.subr.bf16.mxu0 0
      %470 = vmatpush1.bf16.msra.mxu0 %v448
      %471 = vmatprep.subr.bf16.mxu0 0
      %472 = vmatpush1.bf16.msra.mxu0 %v449
      %473 = vmatprep.subr.bf16.mxu0 0
      %474 = vmatpush1.bf16.msra.mxu0 %v450
      %475 = vmatprep.subr.bf16.mxu0 0
      %476 = vmatpush1.bf16.msra.mxu0 0
      %477 = vmatprep.subr.bf16.mxu0 0
      %478 = vmatpush1.bf16.msra.mxu0 0
      %479 = vmatprep.subr.bf16.mxu0 0
      %480 = vmatpush1.bf16.msra.mxu0 0
      %481 = vmatprep.subr.bf16.mxu0 0
      %482 = vmatpush1.bf16.msra.mxu0 0
      %483 = vmatprep.subr.bf16.mxu0 0
      %484 = vmatpush1.bf16.msra.mxu0 0
      %485 = vmatprep.subr.bf16.mxu0 0
      %486 = vmatpush1.bf16.msra.mxu0 0
      %487 = vmatprep.subr.bf16.mxu0 0
      %488 = vmatpush1.bf16.msra.mxu0 0
      %489 = vmatprep.subr.bf16.mxu0 0
      %490 = vmatpush1.bf16.msra.mxu0 0
      %491 = vmatprep.mubr.bf16.mxu0 0
      %492 = vmatmul.mubr.bf16.gmra.mrb[0].mxu0 %v361
      %v493 = vpop.f32.mrb[0].mxu0
      %v494 = vadd.f32 0.0, %v493
      %v495 = vpop.f32.mrb[0].mxu0
      %v496 = vpop.f32.mrb[0].mxu0
      %v497 = vadd.f32 0.0, %v496
      %v498 = vpop.f32.mrb[0].mxu0
      %499 = vmatprep.mubr.bf16.mxu0 0
      %500 = vmatmul.mubr.bf16.gmra.mrb[0].mxu0 %v362
      %v501 = vpop.f32.mrb[0].mxu0
      %v502 = vadd.f32 0.0, %v501
      %v503 = vpop.f32.mrb[0].mxu0
      %v504 = vpop.f32.mrb[0].mxu0
      %v505 = vadd.f32 0.0, %v504
      %v506 = vpop.f32.mrb[0].mxu0
      %507 = vmatprep.mubr.bf16.mxu0 0
      %508 = vmatmul.mubr.bf16.gmra.mrb[0].mxu0 %v363
      %v509 = vpop.f32.mrb[0].mxu0
      %v510 = vadd.f32 0.0, %v509
      %v511 = vpop.f32.mrb[0].mxu0
      %v512 = vpop.f32.mrb[0].mxu0
      %v513 = vadd.f32 0.0, %v512
      %v514 = vpop.f32.mrb[0].mxu0
      %515 = vmatprep.mubr.bf16.mxu0 0
      %516 = vmatmul.mubr.bf16.gmra.mrb[0].mxu0 %v364
      %v517 = vpop.f32.mrb[0].mxu0
      %v518 = vadd.f32 0.0, %v517
      %v519 = vpop.f32.mrb[0].mxu0
      %v520 = vpop.f32.mrb[0].mxu0
      %v521 = vadd.f32 0.0, %v520
      %v522 = vpop.f32.mrb[0].mxu0
      %523 = vmatprep.mubr.bf16.mxu0 0
      %524 = vmatmul.mubr.bf16.gmra.mrb[0].mxu0 %v365
      %v525 = vpop.f32.mrb[0].mxu0
      %v526 = vadd.f32 0.0, %v525
      %v527 = vpop.f32.mrb[0].mxu0
      %v528 = vpop.f32.mrb[0].mxu0
      %v529 = vadd.f32 0.0, %v528
      %v530 = vpop.f32.mrb[0].mxu0
      %531 = vmatprep.mubr.bf16.mxu0 0
      %532 = vmatmul.mubr.bf16.gmra.mrb[0].mxu0 %v366
      %v533 = vpop.f32.mrb[0].mxu0
      %v534 = vadd.f32 0.0, %v533
      %v535 = vpop.f32.mrb[0].mxu0
      %v536 = vpop.f32.mrb[0].mxu0
      %v537 = vadd.f32 0.0, %v536
      %v538 = vpop.f32.mrb[0].mxu0
      %539 = vmatprep.mubr.bf16.mxu0 0
      %540 = vmatmul.mubr.bf16.gmra.mrb[0].mxu0 %v367
      %v541 = vpop.f32.mrb[0].mxu0
      %v542 = vadd.f32 0.0, %v541
      %v543 = vpop.f32.mrb[0].mxu0
      %v544 = vpop.f32.mrb[0].mxu0
      %v545 = vadd.f32 0.0, %v544
      %v546 = vpop.f32.mrb[0].mxu0
      %547 = vmatprep.mubr.bf16.mxu0 0
      %548 = vmatmul.mubr.bf16.gmra.mrb[0].mxu0 %v368
      %v549 = vpop.f32.mrb[0].mxu0
      %v550 = vadd.f32 0.0, %v549
      %v551 = vpop.f32.mrb[0].mxu0
      %v552 = vpop.f32.mrb[0].mxu0
      %v553 = vadd.f32 0.0, %v552
      %v554 = vpop.f32.mrb[0].mxu0
      %555 = vmatprep.mubr.bf16.mxu0 0
      %556 = vmatmul.mubr.bf16.gmra.mrb[0].mxu0 %v369
      %v557 = vpop.f32.mrb[0].mxu0
      %v558 = vadd.f32 0.0, %v557
      %v559 = vpop.f32.mrb[0].mxu0
      %v560 = vpop.f32.mrb[0].mxu0
      %v561 = vadd.f32 0.0, %v560
      %v562 = vpop.f32.mrb[0].mxu0
      %563 = vmatprep.mubr.bf16.mxu0 0
      %564 = vmatmul.mubr.bf16.gmra.mrb[0].mxu0 %v370
      %v565 = vpop.f32.mrb[0].mxu0
      %v566 = vadd.f32 0.0, %v565
      %v567 = vpop.f32.mrb[0].mxu0
      %v568 = vpop.f32.mrb[0].mxu0
      %v569 = vadd.f32 0.0, %v568
      %v570 = vpop.f32.mrb[0].mxu0
      %571 = vmatprep.mubr.bf16.mxu0 0
      %572 = vmatmul.mubr.bf16.gmra.mrb[0].mxu0 %v371
      %v573 = vpop.f32.mrb[0].mxu0
      %v574 = vadd.f32 0.0, %v573
      %v575 = vpop.f32.mrb[0].mxu0
      %v576 = vpop.f32.mrb[0].mxu0
      %v577 = vadd.f32 0.0, %v576
      %v578 = vpop.f32.mrb[0].mxu0
      %579 = vmatprep.mubr.bf16.mxu0 0
      %580 = vmatmul.mubr.bf16.gmra.mrb[0].mxu0 %v372
      %v581 = vpop.f32.mrb[0].mxu0
      %v582 = vadd.f32 0.0, %v581
      %v583 = vpop.f32.mrb[0].mxu0
      %v584 = vpop.f32.mrb[0].mxu0
      %v585 = vadd.f32 0.0, %v584
      %v586 = vpop.f32.mrb[0].mxu0
      %587 = vmatprep.mubr.bf16.mxu0 0
      %588 = vmatmul.mubr.bf16.gmra.mrb[0].mxu0 %v373
      %v589 = vpop.f32.mrb[0].mxu0
      %v590 = vadd.f32 0.0, %v589
      %v591 = vpop.f32.mrb[0].mxu0
      %v592 = vpop.f32.mrb[0].mxu0
      %v593 = vadd.f32 0.0, %v592
      %v594 = vpop.f32.mrb[0].mxu0
      %595 = vmatprep.mubr.bf16.mxu0 0
      %596 = vmatmul.mubr.bf16.gmra.mrb[0].mxu0 %v374
      %v597 = vpop.f32.mrb[0].mxu0
      %v598 = vadd.f32 0.0, %v597
      %v599 = vpop.f32.mrb[0].mxu0
      %v600 = vpop.f32.mrb[0].mxu0
      %v601 = vadd.f32 0.0, %v600
      %v602 = vpop.f32.mrb[0].mxu0
      %603 = vmatprep.mubr.bf16.mxu0 0
      %604 = vmatmul.mubr.bf16.gmra.mrb[0].mxu0 %v375
      %v605 = vpop.f32.mrb[0].mxu0
      %v606 = vadd.f32 0.0, %v605
      %v607 = vpop.f32.mrb[0].mxu0
      %v608 = vpop.f32.mrb[0].mxu0
      %v609 = vadd.f32 0.0, %v608
      %v610 = vpop.f32.mrb[0].mxu0
      %611 = vmatprep.mubr.bf16.mxu0 0
      %612 = vmatmul.mubr.bf16.gmra.mrb[0].mxu0 %v376
      %v613 = vpop.f32.mrb[0].mxu0
      %v614 = vadd.f32 0.0, %v613
      %v615 = vpop.f32.mrb[0].mxu0
      %v616 = vpop.f32.mrb[0].mxu0
      %v617 = vadd.f32 0.0, %v616
      %v618 = vpop.f32.mrb[0].mxu0
      %619 = vmatprep.mubr.bf16.mxu0 0
      %620 = vmatmul.mubr.bf16.gmra.mrb[0].mxu0 %v377
      %v621 = vpop.f32.mrb[0].mxu0
      %v622 = vadd.f32 0.0, %v621
      %v623 = vpop.f32.mrb[0].mxu0
      %v624 = vpop.f32.mrb[0].mxu0
      %v625 = vadd.f32 0.0, %v624
      %v626 = vpop.f32.mrb[0].mxu0
      %627 = vmatprep.mubr.bf16.mxu0 0
      %628 = vmatmul.mubr.bf16.gmra.mrb[0].mxu0 %v378
      %v629 = vpop.f32.mrb[0].mxu0
      %v630 = vadd.f32 0.0, %v629
      %v631 = vpop.f32.mrb[0].mxu0
      %v632 = vpop.f32.mrb[0].mxu0
      %v633 = vadd.f32 0.0, %v632
      %v634 = vpop.f32.mrb[0].mxu0
      %635 = vmatprep.mubr.bf16.mxu0 0
      %636 = vmatmul.mubr.bf16.gmra.mrb[0].mxu0 %v379
      %v637 = vpop.f32.mrb[0].mxu0
      %v638 = vadd.f32 0.0, %v637
      %v639 = vpop.f32.mrb[0].mxu0
      %v640 = vpop.f32.mrb[0].mxu0
      %v641 = vadd.f32 0.0, %v640
      %v642 = vpop.f32.mrb[0].mxu0
      %643 = vmatprep.mubr.bf16.mxu0 0
      %644 = vmatmul.mubr.bf16.gmra.mrb[0].mxu0 %v380
      %v645 = vpop.f32.mrb[0].mxu0
      %v646 = vadd.f32 0.0, %v645
      %v647 = vpop.f32.mrb[0].mxu0
      %v648 = vpop.f32.mrb[0].mxu0
      %v649 = vadd.f32 0.0, %v648
      %v650 = vpop.f32.mrb[0].mxu0
      %651 = vmatprep.mubr.bf16.mxu0 0
      %652 = vmatmul.mubr.bf16.gmra.mrb[0].mxu0 %v381
      %v653 = vpop.f32.mrb[0].mxu0
      %v654 = vadd.f32 0.0, %v653
      %v655 = vpop.f32.mrb[0].mxu0
      %v656 = vpop.f32.mrb[0].mxu0
      %v657 = vadd.f32 0.0, %v656
      %v658 = vpop.f32.mrb[0].mxu0
      %659 = vmatprep.mubr.bf16.mxu0 0
      %660 = vmatmul.mubr.bf16.gmra.mrb[0].mxu0 %v382
      %v661 = vpop.f32.mrb[0].mxu0
      %v662 = vadd.f32 0.0, %v661
      %v663 = vpop.f32.mrb[0].mxu0
      %v664 = vpop.f32.mrb[0].mxu0
      %v665 = vadd.f32 0.0, %v664
      %v666 = vpop.f32.mrb[0].mxu0
      %667 = vmatprep.mubr.bf16.mxu0 0
      %668 = vmatmul.mubr.bf16.gmra.mrb[0].mxu0 %v383
      %v669 = vpop.f32.mrb[0].mxu0
      %v670 = vadd.f32 0.0, %v669
      %v671 = vpop.f32.mrb[0].mxu0
      %v672 = vpop.f32.mrb[0].mxu0
      %v673 = vadd.f32 0.0, %v672
      %v674 = vpop.f32.mrb[0].mxu0
      %675 = vmatprep.mubr.bf16.mxu0 0
      %676 = vmatmul.mubr.bf16.gmra.mrb[0].mxu0 %v384
      %v677 = vpop.f32.mrb[0].mxu0
      %v678 = vadd.f32 0.0, %v677
      %v679 = vpop.f32.mrb[0].mxu0
      %v680 = vpop.f32.mrb[0].mxu0
      %v681 = vadd.f32 0.0, %v680
      %v682 = vpop.f32.mrb[0].mxu0
      %683 = vmatprep.mubr.bf16.mxu0 0
      %684 = vmatmul.mubr.bf16.gmra.mrb[0].mxu0 %v385
      %v685 = vpop.f32.mrb[0].mxu0
      %v686 = vadd.f32 0.0, %v685
      %v687 = vpop.f32.mrb[0].mxu0
      %v688 = vpop.f32.mrb[0].mxu0
      %v689 = vadd.f32 0.0, %v688
      %v690 = vpop.f32.mrb[0].mxu0
      %691 = vdwg.mxu0
      %vm692 = vcmp.ge.f32.partialorder %v494, 0.0
      %vm693 = vcmp.ge.f32.partialorder %v497, 0.0
      %vm694 = vcmp.ge.f32.partialorder %v502, 0.0
      %vm695 = vcmp.ge.f32.partialorder %v505, 0.0
      %vm696 = vcmp.ge.f32.partialorder %v510, 0.0
      %vm697 = vcmp.ge.f32.partialorder %v513, 0.0
      %vm698 = vcmp.ge.f32.partialorder %v518, 0.0
      %vm699 = vcmp.ge.f32.partialorder %v521, 0.0
      %vm700 = vcmp.ge.f32.partialorder %v526, 0.0
      %vm701 = vcmp.ge.f32.partialorder %v529, 0.0
      %vm702 = vcmp.ge.f32.partialorder %v534, 0.0
      %vm703 = vcmp.ge.f32.partialorder %v537, 0.0
      %vm704 = vcmp.ge.f32.partialorder %v542, 0.0
      %vm705 = vcmp.ge.f32.partialorder %v545, 0.0
      %vm706 = vcmp.ge.f32.partialorder %v550, 0.0
      %vm707 = vcmp.ge.f32.partialorder %v553, 0.0
      %vm708 = vcmp.ge.f32.partialorder %v558, 0.0
      %vm709 = vcmp.ge.f32.partialorder %v561, 0.0
      %vm710 = vcmp.ge.f32.partialorder %v566, 0.0
      %vm711 = vcmp.ge.f32.partialorder %v569, 0.0
      %vm712 = vcmp.ge.f32.partialorder %v574, 0.0
      %vm713 = vcmp.ge.f32.partialorder %v577, 0.0
      %vm714 = vcmp.ge.f32.partialorder %v582, 0.0
      %vm715 = vcmp.ge.f32.partialorder %v585, 0.0
      %vm716 = vcmp.ge.f32.partialorder %v590, 0.0
      %vm717 = vcmp.ge.f32.partialorder %v593, 0.0
      %vm718 = vcmp.ge.f32.partialorder %v598, 0.0
      %vm719 = vcmp.ge.f32.partialorder %v601, 0.0
      %vm720 = vcmp.ge.f32.partialorder %v606, 0.0
      %vm721 = vcmp.ge.f32.partialorder %v609, 0.0
      %vm722 = vcmp.ge.f32.partialorder %v614, 0.0
      %vm723 = vcmp.ge.f32.partialorder %v617, 0.0
      %vm724 = vcmp.ge.f32.partialorder %v622, 0.0
      %vm725 = vcmp.ge.f32.partialorder %v625, 0.0
      %vm726 = vcmp.ge.f32.partialorder %v630, 0.0
      %vm727 = vcmp.ge.f32.partialorder %v633, 0.0
      %vm728 = vcmp.ge.f32.partialorder %v638, 0.0
      %vm729 = vcmp.ge.f32.partialorder %v641, 0.0
      %vm730 = vcmp.ge.f32.partialorder %v646, 0.0
      %vm731 = vcmp.ge.f32.partialorder %v649, 0.0
      %vm732 = vcmp.ge.f32.partialorder %v654, 0.0
      %vm733 = vcmp.ge.f32.partialorder %v657, 0.0
      %vm734 = vcmp.ge.f32.partialorder %v662, 0.0
      %vm735 = vcmp.ge.f32.partialorder %v665, 0.0
      %vm736 = vcmp.ge.f32.partialorder %v670, 0.0
      %vm737 = vcmp.ge.f32.partialorder %v673, 0.0
      %vm738 = vcmp.ge.f32.partialorder %v678, 0.0
      %vm739 = vcmp.ge.f32.partialorder %v681, 0.0
      %vm740 = vcmp.ge.f32.partialorder %v686, 0.0
      %vm741 = vcmp.ge.f32.partialorder %v689, 0.0
      %v742 = vmul.f32 %v494, 0.3
      %v743 = vmul.f32 %v497, 0.3
      %v744 = vmul.f32 %v502, 0.3
      %v745 = vmul.f32 %v505, 0.3
      %v746 = vmul.f32 %v510, 0.3
      %v747 = vmul.f32 %v513, 0.3
      %v748 = vmul.f32 %v518, 0.3
      %v749 = vmul.f32 %v521, 0.3
      %v750 = vmul.f32 %v526, 0.3
      %v751 = vmul.f32 %v529, 0.3
      %v752 = vmul.f32 %v534, 0.3
      %v753 = vmul.f32 %v537, 0.3
      %v754 = vmul.f32 %v542, 0.3
      %v755 = vmul.f32 %v545, 0.3
      %v756 = vmul.f32 %v550, 0.3
      %v757 = vmul.f32 %v553, 0.3
      %v758 = vmul.f32 %v558, 0.3
      %v759 = vmul.f32 %v561, 0.3
      %v760 = vmul.f32 %v566, 0.3
      %v761 = vmul.f32 %v569, 0.3
      %v762 = vmul.f32 %v574, 0.3
      %v763 = vmul.f32 %v577, 0.3
      %v764 = vmul.f32 %v582, 0.3
      %v765 = vmul.f32 %v585, 0.3
      %v766 = vmul.f32 %v590, 0.3
      %v767 = vmul.f32 %v593, 0.3
      %v768 = vmul.f32 %v598, 0.3
      %v769 = vmul.f32 %v601, 0.3
      %v770 = vmul.f32 %v606, 0.3
      %v771 = vmul.f32 %v609, 0.3
      %v772 = vmul.f32 %v614, 0.3
      %v773 = vmul.f32 %v617, 0.3
      %v774 = vmul.f32 %v622, 0.3
      %v775 = vmul.f32 %v625, 0.3
      %v776 = vmul.f32 %v630, 0.3
      %v777 = vmul.f32 %v633, 0.3
      %v778 = vmul.f32 %v638, 0.3
      %v779 = vmul.f32 %v641, 0.3
      %v780 = vmul.f32 %v646, 0.3
      %v781 = vmul.f32 %v649, 0.3
      %v782 = vmul.f32 %v654, 0.3
      %v783 = vmul.f32 %v657, 0.3
      %v784 = vmul.f32 %v662, 0.3
      %v785 = vmul.f32 %v665, 0.3
      %v786 = vmul.f32 %v670, 0.3
      %v787 = vmul.f32 %v673, 0.3
      %v788 = vmul.f32 %v678, 0.3
      %v789 = vmul.f32 %v681, 0.3
      %v790 = vmul.f32 %v686, 0.3
      %v791 = vmul.f32 %v689, 0.3
      %v792 = vsel %vm692, %v494, %v742
      %v793 = vsel %vm693, %v497, %v743
      %v794 = vsel %vm694, %v502, %v744
      %v795 = vsel %vm695, %v505, %v745
      %v796 = vsel %vm696, %v510, %v746
      %v797 = vsel %vm697, %v513, %v747
      %v798 = vsel %vm698, %v518, %v748
      %v799 = vsel %vm699, %v521, %v749
      %v800 = vsel %vm700, %v526, %v750
      %v801 = vsel %vm701, %v529, %v751
      %v802 = vsel %vm702, %v534, %v752
      %v803 = vsel %vm703, %v537, %v753
      %v804 = vsel %vm704, %v542, %v754
      %v805 = vsel %vm705, %v545, %v755
      %v806 = vsel %vm706, %v550, %v756
      %v807 = vsel %vm707, %v553, %v757
      %v808 = vsel %vm708, %v558, %v758
      %v809 = vsel %vm709, %v561, %v759
      %v810 = vsel %vm710, %v566, %v760
      %v811 = vsel %vm711, %v569, %v761
      %v812 = vsel %vm712, %v574, %v762
      %v813 = vsel %vm713, %v577, %v763
      %v814 = vsel %vm714, %v582, %v764
      %v815 = vsel %vm715, %v585, %v765
      %v816 = vsel %vm716, %v590, %v766
      %v817 = vsel %vm717, %v593, %v767
      %v818 = vsel %vm718, %v598, %v768
      %v819 = vsel %vm719, %v601, %v769
      %v820 = vsel %vm720, %v606, %v770
      %v821 = vsel %vm721, %v609, %v771
      %v822 = vsel %vm722, %v614, %v772
      %v823 = vsel %vm723, %v617, %v773
      %v824 = vsel %vm724, %v622, %v774
      %v825 = vsel %vm725, %v625, %v775
      %v826 = vsel %vm726, %v630, %v776
      %v827 = vsel %vm727, %v633, %v777
      %v828 = vsel %vm728, %v638, %v778
      %v829 = vsel %vm729, %v641, %v779
      %v830 = vsel %vm730, %v646, %v780
      %v831 = vsel %vm731, %v649, %v781
      %v832 = vsel %vm732, %v654, %v782
      %v833 = vsel %vm733, %v657, %v783
      %v834 = vsel %vm734, %v662, %v784
      %v835 = vsel %vm735, %v665, %v785
      %v836 = vsel %vm736, %v670, %v786
      %v837 = vsel %vm737, %v673, %v787
      %v838 = vsel %vm738, %v678, %v788
      %v839 = vsel %vm739, %v681, %v789
      %v840 = vsel %vm740, %v686, %v790
      %v841 = vsel %vm741, %v689, %v791
      %v842 = vpack.c.bf16 %v793, %v792
      %v843 = vpack.c.bf16 %v795, %v794
      %v844 = vpack.c.bf16 %v797, %v796
      %v845 = vpack.c.bf16 %v799, %v798
      %v846 = vpack.c.bf16 %v801, %v800
      %v847 = vpack.c.bf16 %v803, %v802
      %v848 = vpack.c.bf16 %v805, %v804
      %v849 = vpack.c.bf16 %v807, %v806
      %v850 = vpack.c.bf16 %v809, %v808
      %v851 = vpack.c.bf16 %v811, %v810
      %v852 = vpack.c.bf16 %v813, %v812
      %v853 = vpack.c.bf16 %v815, %v814
      %v854 = vpack.c.bf16 %v817, %v816
      %v855 = vpack.c.bf16 %v819, %v818
      %v856 = vpack.c.bf16 %v821, %v820
      %v857 = vpack.c.bf16 %v823, %v822
      %v858 = vpack.c.bf16 %v825, %v824
      %v859 = vpack.c.bf16 %v827, %v826
      %v860 = vpack.c.bf16 %v829, %v828
      %v861 = vpack.c.bf16 %v831, %v830
      %v862 = vpack.c.bf16 %v833, %v832
      %v863 = vpack.c.bf16 %v835, %v834
      %v864 = vpack.c.bf16 %v837, %v836
      %v865 = vpack.c.bf16 %v839, %v838
      %v866 = vpack.c.bf16 %v841, %v840
      %v867 = vld [vmem:[%s2] sm:$0xf]
      %v868 = vld [vmem:[%s2 + $0x4] sm:$0xf]
      %v869 = vld [vmem:[%s2 + $0x8] sm:$0xf]
      %v870 = vld [vmem:[%s2 + $0xc] sm:$0xf]
      %v873 = vunpack.c.l.b16 %v869
      %v874 = vunpack.c.l.b16 %v870
      %v875 = vpack.c.b16 %v874, %v873
      %vm877 = vcmask 130048
      %v879 = vsel %vm877, %v843, 0
      %881 = vmatprep.subr.bf16.mxu0 0
      %882 = vmatpush1.bf16.msra.mxu0 %v875
      %883 = vmatprep.subr.bf16.mxu0 0
      %884 = vmatpush1.bf16.msra.mxu0 0
      %885 = vmatprep.subr.bf16.mxu0 0
      %886 = vmatpush1.bf16.msra.mxu0 0
      %887 = vmatprep.subr.bf16.mxu0 0
      %888 = vmatpush1.bf16.msra.mxu0 0
      %889 = vmatprep.subr.bf16.mxu0 0
      %890 = vmatpush1.bf16.msra.mxu0 0
      %891 = vmatprep.subr.bf16.mxu0 0
      %892 = vmatpush1.bf16.msra.mxu0 0
      %893 = vmatprep.subr.bf16.mxu0 0
      %894 = vmatpush1.bf16.msra.mxu0 0
      %895 = vmatprep.subr.bf16.mxu0 0
      %896 = vmatpush1.bf16.msra.mxu0 0
      %897 = vmatprep.subr.bf16.mxu0 0
      %898 = vmatpush1.bf16.msra.mxu0 0
      %899 = vmatprep.subr.bf16.mxu0 0
      %900 = vmatpush1.bf16.msra.mxu0 0
      %901 = vmatprep.subr.bf16.mxu0 0
      %902 = vmatpush1.bf16.msra.mxu0 0
      %903 = vmatprep.subr.bf16.mxu0 0
      %904 = vmatpush1.bf16.msra.mxu0 0
      %905 = vmatprep.subr.bf16.mxu0 0
      %906 = vmatpush1.bf16.msra.mxu0 0
      %907 = vmatprep.subr.bf16.mxu0 0
      %908 = vmatpush1.bf16.msra.mxu0 0
      %909 = vmatprep.subr.bf16.mxu0 0
      %910 = vmatpush1.bf16.msra.mxu0 0
      %911 = vmatprep.subr.bf16.mxu0 0
      %912 = vmatpush1.bf16.msra.mxu0 0
      %913 = vmatprep.mubr.bf16.mxu0 0
      %914 = vmatmul.mubr.bf16.gmra.mrb[0].mxu0 %v879
      %v915 = vpop.f32.mrb[0].mxu0
      %v916 = vadd.f32 0.0, %v915
      %v917 = vpop.f32.mrb[0].mxu0
      %v918 = vpop.f32.mrb[0].mxu0
      %v919 = vadd.f32 0.0, %v918
      %v920 = vpop.f32.mrb[0].mxu0
      %921 = vdwg.mxu0
      %v924 = vunpack.c.l.b16 %v867
      %v925 = vunpack.c.l.b16 %v868
      %v926 = vpack.c.b16 %v925, %v924
      %v929 = vsel %vm877, %v842, 0
      %931 = vmatprep.subr.bf16.mxu0 0
      %932 = vmatpush1.bf16.msra.mxu0 %v926
      %933 = vmatprep.subr.bf16.mxu0 0
      %934 = vmatpush1.bf16.msra.mxu0 0
      %935 = vmatprep.subr.bf16.mxu0 0
      %936 = vmatpush1.bf16.msra.mxu0 0
      %937 = vmatprep.subr.bf16.mxu0 0
      %938 = vmatpush1.bf16.msra.mxu0 0
      %939 = vmatprep.subr.bf16.mxu0 0
      %940 = vmatpush1.bf16.msra.mxu0 0
      %941 = vmatprep.subr.bf16.mxu0 0
      %942 = vmatpush1.bf16.msra.mxu0 0
      %943 = vmatprep.subr.bf16.mxu0 0
      %944 = vmatpush1.bf16.msra.mxu0 0
      %945 = vmatprep.subr.bf16.mxu0 0
      %946 = vmatpush1.bf16.msra.mxu0 0
      %947 = vmatprep.subr.bf16.mxu0 0
      %948 = vmatpush1.bf16.msra.mxu0 0
      %949 = vmatprep.subr.bf16.mxu0 0
      %950 = vmatpush1.bf16.msra.mxu0 0
      %951 = vmatprep.subr.bf16.mxu0 0
      %952 = vmatpush1.bf16.msra.mxu0 0
      %953 = vmatprep.subr.bf16.mxu0 0
      %954 = vmatpush1.bf16.msra.mxu0 0
      %955 = vmatprep.subr.bf16.mxu0 0
      %956 = vmatpush1.bf16.msra.mxu0 0
      %957 = vmatprep.subr.bf16.mxu0 0
      %958 = vmatpush1.bf16.msra.mxu0 0
      %959 = vmatprep.subr.bf16.mxu0 0
      %960 = vmatpush1.bf16.msra.mxu0 0
      %961 = vmatprep.subr.bf16.mxu0 0
      %962 = vmatpush1.bf16.msra.mxu0 0
      %963 = vmatprep.mubr.bf16.mxu0 0
      %964 = vmatmul.mubr.bf16.gmra.mrb[0].mxu0 %v929
      %v965 = vpop.f32.mrb[0].mxu0
      %v966 = vadd.f32 %v916, %v965
      %v967 = vpop.f32.mrb[0].mxu0
      %v968 = vpop.f32.mrb[0].mxu0
      %v969 = vadd.f32 %v919, %v968
      %v970 = vpop.f32.mrb[0].mxu0
      %971 = vdwg.mxu0
      %v972 = vld [vmem:[%s2 + $0x10] sm:$0xf]
      %v973 = vld [vmem:[%s2 + $0x14] sm:$0xf]
      %v976 = vunpack.c.l.b16 %v972
      %v977 = vunpack.c.l.b16 %v973
      %v978 = vpack.c.b16 %v977, %v976
      %v981 = vsel %vm877, %v844, 0
      %983 = vmatprep.subr.bf16.mxu0 0
      %984 = vmatpush1.bf16.msra.mxu0 %v978
      %985 = vmatprep.subr.bf16.mxu0 0
      %986 = vmatpush1.bf16.msra.mxu0 0
      %987 = vmatprep.subr.bf16.mxu0 0
      %988 = vmatpush1.bf16.msra.mxu0 0
      %989 = vmatprep.subr.bf16.mxu0 0
      %990 = vmatpush1.bf16.msra.mxu0 0
      %991 = vmatprep.subr.bf16.mxu0 0
      %992 = vmatpush1.bf16.msra.mxu0 0
      %993 = vmatprep.subr.bf16.mxu0 0
      %994 = vmatpush1.bf16.msra.mxu0 0
      %995 = vmatprep.subr.bf16.mxu0 0
      %996 = vmatpush1.bf16.msra.mxu0 0
      %997 = vmatprep.subr.bf16.mxu0 0
      %998 = vmatpush1.bf16.msra.mxu0 0
      %999 = vmatprep.subr.bf16.mxu0 0
      %1000 = vmatpush1.bf16.msra.mxu0 0
      %1001 = vmatprep.subr.bf16.mxu0 0
      %1002 = vmatpush1.bf16.msra.mxu0 0
      %1003 = vmatprep.subr.bf16.mxu0 0
      %1004 = vmatpush1.bf16.msra.mxu0 0
      %1005 = vmatprep.subr.bf16.mxu0 0
      %1006 = vmatpush1.bf16.msra.mxu0 0
      %1007 = vmatprep.subr.bf16.mxu0 0
      %1008 = vmatpush1.bf16.msra.mxu0 0
      %1009 = vmatprep.subr.bf16.mxu0 0
      %1010 = vmatpush1.bf16.msra.mxu0 0
      %1011 = vmatprep.subr.bf16.mxu0 0
      %1012 = vmatpush1.bf16.msra.mxu0 0
      %1013 = vmatprep.subr.bf16.mxu0 0
      %1014 = vmatpush1.bf16.msra.mxu0 0
      %1015 = vmatprep.mubr.bf16.mxu0 0
      %1016 = vmatmul.mubr.bf16.gmra.mrb[0].mxu0 %v981
      %v1017 = vpop.f32.mrb[0].mxu0
      %v1018 = vadd.f32 0.0, %v1017
      %v1019 = vpop.f32.mrb[0].mxu0
      %v1020 = vpop.f32.mrb[0].mxu0
      %v1021 = vadd.f32 0.0, %v1020
      %v1022 = vpop.f32.mrb[0].mxu0
      %1023 = vdwg.mxu0
      %v1024 = vadd.f32 %v966, %v1018
      %v1025 = vadd.f32 %v969, %v1021
      %v1026 = vld [vmem:[%s2 + $0x18] sm:$0xf]
      %v1027 = vld [vmem:[%s2 + $0x1c] sm:$0xf]
      %v1030 = vunpack.c.l.b16 %v1026
      %v1031 = vunpack.c.l.b16 %v1027
      %v1032 = vpack.c.b16 %v1031, %v1030
      %v1035 = vsel %vm877, %v845, 0
      %1037 = vmatprep.subr.bf16.mxu0 0
      %1038 = vmatpush1.bf16.msra.mxu0 %v1032
      %1039 = vmatprep.subr.bf16.mxu0 0
      %1040 = vmatpush1.bf16.msra.mxu0 0
      %1041 = vmatprep.subr.bf16.mxu0 0
      %1042 = vmatpush1.bf16.msra.mxu0 0
      %1043 = vmatprep.subr.bf16.mxu0 0
      %1044 = vmatpush1.bf16.msra.mxu0 0
      %1045 = vmatprep.subr.bf16.mxu0 0
      %1046 = vmatpush1.bf16.msra.mxu0 0
      %1047 = vmatprep.subr.bf16.mxu0 0
      %1048 = vmatpush1.bf16.msra.mxu0 0
      %1049 = vmatprep.subr.bf16.mxu0 0
      %1050 = vmatpush1.bf16.msra.mxu0 0
      %1051 = vmatprep.subr.bf16.mxu0 0
      %1052 = vmatpush1.bf16.msra.mxu0 0
      %1053 = vmatprep.subr.bf16.mxu0 0
      %1054 = vmatpush1.bf16.msra.mxu0 0
      %1055 = vmatprep.subr.bf16.mxu0 0
      %1056 = vmatpush1.bf16.msra.mxu0 0
      %1057 = vmatprep.subr.bf16.mxu0 0
      %1058 = vmatpush1.bf16.msra.mxu0 0
      %1059 = vmatprep.subr.bf16.mxu0 0
      %1060 = vmatpush1.bf16.msra.mxu0 0
      %1061 = vmatprep.subr.bf16.mxu0 0
      %1062 = vmatpush1.bf16.msra.mxu0 0
      %1063 = vmatprep.subr.bf16.mxu0 0
      %1064 = vmatpush1.bf16.msra.mxu0 0
      %1065 = vmatprep.subr.bf16.mxu0 0
      %1066 = vmatpush1.bf16.msra.mxu0 0
      %1067 = vmatprep.subr.bf16.mxu0 0
      %1068 = vmatpush1.bf16.msra.mxu0 0
      %1069 = vmatprep.mubr.bf16.mxu0 0
      %1070 = vmatmul.mubr.bf16.gmra.mrb[0].mxu0 %v1035
      %v1071 = vpop.f32.mrb[0].mxu0
      %v1072 = vadd.f32 0.0, %v1071
      %v1073 = vpop.f32.mrb[0].mxu0
      %v1074 = vpop.f32.mrb[0].mxu0
      %v1075 = vadd.f32 0.0, %v1074
      %v1076 = vpop.f32.mrb[0].mxu0
      %1077 = vdwg.mxu0
      %v1078 = vadd.f32 %v1024, %v1072
      %v1079 = vadd.f32 %v1025, %v1075
      %v1080 = vld [vmem:[%s2 + $0x20] sm:$0xf]
      %v1081 = vld [vmem:[%s2 + $0x24] sm:$0xf]
      %v1084 = vunpack.c.l.b16 %v1080
      %v1085 = vunpack.c.l.b16 %v1081
      %v1086 = vpack.c.b16 %v1085, %v1084
      %v1089 = vsel %vm877, %v846, 0
      %1091 = vmatprep.subr.bf16.mxu0 0
      %1092 = vmatpush1.bf16.msra.mxu0 %v1086
      %1093 = vmatprep.subr.bf16.mxu0 0
      %1094 = vmatpush1.bf16.msra.mxu0 0
      %1095 = vmatprep.subr.bf16.mxu0 0
      %1096 = vmatpush1.bf16.msra.mxu0 0
      %1097 = vmatprep.subr.bf16.mxu0 0
      %1098 = vmatpush1.bf16.msra.mxu0 0
      %1099 = vmatprep.subr.bf16.mxu0 0
      %1100 = vmatpush1.bf16.msra.mxu0 0
      %1101 = vmatprep.subr.bf16.mxu0 0
      %1102 = vmatpush1.bf16.msra.mxu0 0
      %1103 = vmatprep.subr.bf16.mxu0 0
      %1104 = vmatpush1.bf16.msra.mxu0 0
      %1105 = vmatprep.subr.bf16.mxu0 0
      %1106 = vmatpush1.bf16.msra.mxu0 0
      %1107 = vmatprep.subr.bf16.mxu0 0
      %1108 = vmatpush1.bf16.msra.mxu0 0
      %1109 = vmatprep.subr.bf16.mxu0 0
      %1110 = vmatpush1.bf16.msra.mxu0 0
      %1111 = vmatprep.subr.bf16.mxu0 0
      %1112 = vmatpush1.bf16.msra.mxu0 0
      %1113 = vmatprep.subr.bf16.mxu0 0
      %1114 = vmatpush1.bf16.msra.mxu0 0
      %1115 = vmatprep.subr.bf16.mxu0 0
      %1116 = vmatpush1.bf16.msra.mxu0 0
      %1117 = vmatprep.subr.bf16.mxu0 0
      %1118 = vmatpush1.bf16.msra.mxu0 0
      %1119 = vmatprep.subr.bf16.mxu0 0
      %1120 = vmatpush1.bf16.msra.mxu0 0
      %1121 = vmatprep.subr.bf16.mxu0 0
      %1122 = vmatpush1.bf16.msra.mxu0 0
      %1123 = vmatprep.mubr.bf16.mxu0 0
      %1124 = vmatmul.mubr.bf16.gmra.mrb[0].mxu0 %v1089
      %v1125 = vpop.f32.mrb[0].mxu0
      %v1126 = vadd.f32 0.0, %v1125
      %v1127 = vpop.f32.mrb[0].mxu0
      %v1128 = vpop.f32.mrb[0].mxu0
      %v1129 = vadd.f32 0.0, %v1128
      %v1130 = vpop.f32.mrb[0].mxu0
      %1131 = vdwg.mxu0
      %v1132 = vadd.f32 %v1078, %v1126
      %v1133 = vadd.f32 %v1079, %v1129
      %v1134 = vld [vmem:[%s2 + $0x28] sm:$0xf]
      %v1135 = vld [vmem:[%s2 + $0x2c] sm:$0xf]
      %v1138 = vunpack.c.l.b16 %v1134
      %v1139 = vunpack.c.l.b16 %v1135
      %v1140 = vpack.c.b16 %v1139, %v1138
      %v1143 = vsel %vm877, %v847, 0
      %1145 = vmatprep.subr.bf16.mxu0 0
      %1146 = vmatpush1.bf16.msra.mxu0 %v1140
      %1147 = vmatprep.subr.bf16.mxu0 0
      %1148 = vmatpush1.bf16.msra.mxu0 0
      %1149 = vmatprep.subr.bf16.mxu0 0
      %1150 = vmatpush1.bf16.msra.mxu0 0
      %1151 = vmatprep.subr.bf16.mxu0 0
      %1152 = vmatpush1.bf16.msra.mxu0 0
      %1153 = vmatprep.subr.bf16.mxu0 0
      %1154 = vmatpush1.bf16.msra.mxu0 0
      %1155 = vmatprep.subr.bf16.mxu0 0
      %1156 = vmatpush1.bf16.msra.mxu0 0
      %1157 = vmatprep.subr.bf16.mxu0 0
      %1158 = vmatpush1.bf16.msra.mxu0 0
      %1159 = vmatprep.subr.bf16.mxu0 0
      %1160 = vmatpush1.bf16.msra.mxu0 0
      %1161 = vmatprep.subr.bf16.mxu0 0
      %1162 = vmatpush1.bf16.msra.mxu0 0
      %1163 = vmatprep.subr.bf16.mxu0 0
      %1164 = vmatpush1.bf16.msra.mxu0 0
      %1165 = vmatprep.subr.bf16.mxu0 0
      %1166 = vmatpush1.bf16.msra.mxu0 0
      %1167 = vmatprep.subr.bf16.mxu0 0
      %1168 = vmatpush1.bf16.msra.mxu0 0
      %1169 = vmatprep.subr.bf16.mxu0 0
      %1170 = vmatpush1.bf16.msra.mxu0 0
      %1171 = vmatprep.subr.bf16.mxu0 0
      %1172 = vmatpush1.bf16.msra.mxu0 0
      %1173 = vmatprep.subr.bf16.mxu0 0
      %1174 = vmatpush1.bf16.msra.mxu0 0
      %1175 = vmatprep.subr.bf16.mxu0 0
      %1176 = vmatpush1.bf16.msra.mxu0 0
      %1177 = vmatprep.mubr.bf16.mxu0 0
      %1178 = vmatmul.mubr.bf16.gmra.mrb[0].mxu0 %v1143
      %v1179 = vpop.f32.mrb[0].mxu0
      %v1180 = vadd.f32 0.0, %v1179
      %v1181 = vpop.f32.mrb[0].mxu0
      %v1182 = vpop.f32.mrb[0].mxu0
      %v1183 = vadd.f32 0.0, %v1182
      %v1184 = vpop.f32.mrb[0].mxu0
      %1185 = vdwg.mxu0
      %v1186 = vadd.f32 %v1132, %v1180
      %v1187 = vadd.f32 %v1133, %v1183
      %v1188 = vld [vmem:[%s2 + $0x30] sm:$0xf]
      %v1189 = vld [vmem:[%s2 + $0x34] sm:$0xf]
      %v1192 = vunpack.c.l.b16 %v1188
      %v1193 = vunpack.c.l.b16 %v1189
      %v1194 = vpack.c.b16 %v1193, %v1192
      %v1197 = vsel %vm877, %v848, 0
      %1199 = vmatprep.subr.bf16.mxu0 0
      %1200 = vmatpush1.bf16.msra.mxu0 %v1194
      %1201 = vmatprep.subr.bf16.mxu0 0
      %1202 = vmatpush1.bf16.msra.mxu0 0
      %1203 = vmatprep.subr.bf16.mxu0 0
      %1204 = vmatpush1.bf16.msra.mxu0 0
      %1205 = vmatprep.subr.bf16.mxu0 0
      %1206 = vmatpush1.bf16.msra.mxu0 0
      %1207 = vmatprep.subr.bf16.mxu0 0
      %1208 = vmatpush1.bf16.msra.mxu0 0
      %1209 = vmatprep.subr.bf16.mxu0 0
      %1210 = vmatpush1.bf16.msra.mxu0 0
      %1211 = vmatprep.subr.bf16.mxu0 0
      %1212 = vmatpush1.bf16.msra.mxu0 0
      %1213 = vmatprep.subr.bf16.mxu0 0
      %1214 = vmatpush1.bf16.msra.mxu0 0
      %1215 = vmatprep.subr.bf16.mxu0 0
      %1216 = vmatpush1.bf16.msra.mxu0 0
      %1217 = vmatprep.subr.bf16.mxu0 0
      %1218 = vmatpush1.bf16.msra.mxu0 0
      %1219 = vmatprep.subr.bf16.mxu0 0
      %1220 = vmatpush1.bf16.msra.mxu0 0
      %1221 = vmatprep.subr.bf16.mxu0 0
      %1222 = vmatpush1.bf16.msra.mxu0 0
      %1223 = vmatprep.subr.bf16.mxu0 0
      %1224 = vmatpush1.bf16.msra.mxu0 0
      %1225 = vmatprep.subr.bf16.mxu0 0
      %1226 = vmatpush1.bf16.msra.mxu0 0
      %1227 = vmatprep.subr.bf16.mxu0 0
      %1228 = vmatpush1.bf16.msra.mxu0 0
      %1229 = vmatprep.subr.bf16.mxu0 0
      %1230 = vmatpush1.bf16.msra.mxu0 0
      %1231 = vmatprep.mubr.bf16.mxu0 0
      %1232 = vmatmul.mubr.bf16.gmra.mrb[0].mxu0 %v1197
      %v1233 = vpop.f32.mrb[0].mxu0
      %v1234 = vadd.f32 0.0, %v1233
      %v1235 = vpop.f32.mrb[0].mxu0
      %v1236 = vpop.f32.mrb[0].mxu0
      %v1237 = vadd.f32 0.0, %v1236
      %v1238 = vpop.f32.mrb[0].mxu0
      %1239 = vdwg.mxu0
      %v1240 = vadd.f32 %v1186, %v1234
      %v1241 = vadd.f32 %v1187, %v1237
      %v1242 = vld [vmem:[%s2 + $0x38] sm:$0xf]
      %v1243 = vld [vmem:[%s2 + $0x3c] sm:$0xf]
      %v1246 = vunpack.c.l.b16 %v1242
      %v1247 = vunpack.c.l.b16 %v1243
      %v1248 = vpack.c.b16 %v1247, %v1246
      %v1251 = vsel %vm877, %v849, 0
      %1253 = vmatprep.subr.bf16.mxu0 0
      %1254 = vmatpush1.bf16.msra.mxu0 %v1248
      %1255 = vmatprep.subr.bf16.mxu0 0
      %1256 = vmatpush1.bf16.msra.mxu0 0
      %1257 = vmatprep.subr.bf16.mxu0 0
      %1258 = vmatpush1.bf16.msra.mxu0 0
      %1259 = vmatprep.subr.bf16.mxu0 0
      %1260 = vmatpush1.bf16.msra.mxu0 0
      %1261 = vmatprep.subr.bf16.mxu0 0
      %1262 = vmatpush1.bf16.msra.mxu0 0
      %1263 = vmatprep.subr.bf16.mxu0 0
      %1264 = vmatpush1.bf16.msra.mxu0 0
      %1265 = vmatprep.subr.bf16.mxu0 0
      %1266 = vmatpush1.bf16.msra.mxu0 0
      %1267 = vmatprep.subr.bf16.mxu0 0
      %1268 = vmatpush1.bf16.msra.mxu0 0
      %1269 = vmatprep.subr.bf16.mxu0 0
      %1270 = vmatpush1.bf16.msra.mxu0 0
      %1271 = vmatprep.subr.bf16.mxu0 0
      %1272 = vmatpush1.bf16.msra.mxu0 0
      %1273 = vmatprep.subr.bf16.mxu0 0
      %1274 = vmatpush1.bf16.msra.mxu0 0
      %1275 = vmatprep.subr.bf16.mxu0 0
      %1276 = vmatpush1.bf16.msra.mxu0 0
      %1277 = vmatprep.subr.bf16.mxu0 0
      %1278 = vmatpush1.bf16.msra.mxu0 0
      %1279 = vmatprep.subr.bf16.mxu0 0
      %1280 = vmatpush1.bf16.msra.mxu0 0
      %1281 = vmatprep.subr.bf16.mxu0 0
      %1282 = vmatpush1.bf16.msra.mxu0 0
      %1283 = vmatprep.subr.bf16.mxu0 0
      %1284 = vmatpush1.bf16.msra.mxu0 0
      %1285 = vmatprep.mubr.bf16.mxu0 0
      %1286 = vmatmul.mubr.bf16.gmra.mrb[0].mxu0 %v1251
      %v1287 = vpop.f32.mrb[0].mxu0
      %v1288 = vadd.f32 0.0, %v1287
      %v1289 = vpop.f32.mrb[0].mxu0
      %v1290 = vpop.f32.mrb[0].mxu0
      %v1291 = vadd.f32 0.0, %v1290
      %v1292 = vpop.f32.mrb[0].mxu0
      %1293 = vdwg.mxu0
      %v1294 = vadd.f32 %v1240, %v1288
      %v1295 = vadd.f32 %v1241, %v1291
      %v1296 = vld [vmem:[%s2 + $0x40] sm:$0xf]
      %v1297 = vld [vmem:[%s2 + $0x44] sm:$0xf]
      %v1300 = vunpack.c.l.b16 %v1296
      %v1301 = vunpack.c.l.b16 %v1297
      %v1302 = vpack.c.b16 %v1301, %v1300
      %v1305 = vsel %vm877, %v850, 0
      %1307 = vmatprep.subr.bf16.mxu0 0
      %1308 = vmatpush1.bf16.msra.mxu0 %v1302
      %1309 = vmatprep.subr.bf16.mxu0 0
      %1310 = vmatpush1.bf16.msra.mxu0 0
      %1311 = vmatprep.subr.bf16.mxu0 0
      %1312 = vmatpush1.bf16.msra.mxu0 0
      %1313 = vmatprep.subr.bf16.mxu0 0
      %1314 = vmatpush1.bf16.msra.mxu0 0
      %1315 = vmatprep.subr.bf16.mxu0 0
      %1316 = vmatpush1.bf16.msra.mxu0 0
      %1317 = vmatprep.subr.bf16.mxu0 0
      %1318 = vmatpush1.bf16.msra.mxu0 0
      %1319 = vmatprep.subr.bf16.mxu0 0
      %1320 = vmatpush1.bf16.msra.mxu0 0
      %1321 = vmatprep.subr.bf16.mxu0 0
      %1322 = vmatpush1.bf16.msra.mxu0 0
      %1323 = vmatprep.subr.bf16.mxu0 0
      %1324 = vmatpush1.bf16.msra.mxu0 0
      %1325 = vmatprep.subr.bf16.mxu0 0
      %1326 = vmatpush1.bf16.msra.mxu0 0
      %1327 = vmatprep.subr.bf16.mxu0 0
      %1328 = vmatpush1.bf16.msra.mxu0 0
      %1329 = vmatprep.subr.bf16.mxu0 0
      %1330 = vmatpush1.bf16.msra.mxu0 0
      %1331 = vmatprep.subr.bf16.mxu0 0
      %1332 = vmatpush1.bf16.msra.mxu0 0
      %1333 = vmatprep.subr.bf16.mxu0 0
      %1334 = vmatpush1.bf16.msra.mxu0 0
      %1335 = vmatprep.subr.bf16.mxu0 0
      %1336 = vmatpush1.bf16.msra.mxu0 0
      %1337 = vmatprep.subr.bf16.mxu0 0
      %1338 = vmatpush1.bf16.msra.mxu0 0
      %1339 = vmatprep.mubr.bf16.mxu0 0
      %1340 = vmatmul.mubr.bf16.gmra.mrb[0].mxu0 %v1305
      %v1341 = vpop.f32.mrb[0].mxu0
      %v1342 = vadd.f32 0.0, %v1341
      %v1343 = vpop.f32.mrb[0].mxu0
      %v1344 = vpop.f32.mrb[0].mxu0
      %v1345 = vadd.f32 0.0, %v1344
      %v1346 = vpop.f32.mrb[0].mxu0
      %1347 = vdwg.mxu0
      %v1348 = vadd.f32 %v1294, %v1342
      %v1349 = vadd.f32 %v1295, %v1345
      %v1350 = vld [vmem:[%s2 + $0x48] sm:$0xf]
      %v1351 = vld [vmem:[%s2 + $0x4c] sm:$0xf]
      %v1354 = vunpack.c.l.b16 %v1350
      %v1355 = vunpack.c.l.b16 %v1351
      %v1356 = vpack.c.b16 %v1355, %v1354
      %v1359 = vsel %vm877, %v851, 0
      %1361 = vmatprep.subr.bf16.mxu0 0
      %1362 = vmatpush1.bf16.msra.mxu0 %v1356
      %1363 = vmatprep.subr.bf16.mxu0 0
      %1364 = vmatpush1.bf16.msra.mxu0 0
      %1365 = vmatprep.subr.bf16.mxu0 0
      %1366 = vmatpush1.bf16.msra.mxu0 0
      %1367 = vmatprep.subr.bf16.mxu0 0
      %1368 = vmatpush1.bf16.msra.mxu0 0
      %1369 = vmatprep.subr.bf16.mxu0 0
      %1370 = vmatpush1.bf16.msra.mxu0 0
      %1371 = vmatprep.subr.bf16.mxu0 0
      %1372 = vmatpush1.bf16.msra.mxu0 0
      %1373 = vmatprep.subr.bf16.mxu0 0
      %1374 = vmatpush1.bf16.msra.mxu0 0
      %1375 = vmatprep.subr.bf16.mxu0 0
      %1376 = vmatpush1.bf16.msra.mxu0 0
      %1377 = vmatprep.subr.bf16.mxu0 0
      %1378 = vmatpush1.bf16.msra.mxu0 0
      %1379 = vmatprep.subr.bf16.mxu0 0
      %1380 = vmatpush1.bf16.msra.mxu0 0
      %1381 = vmatprep.subr.bf16.mxu0 0
      %1382 = vmatpush1.bf16.msra.mxu0 0
      %1383 = vmatprep.subr.bf16.mxu0 0
      %1384 = vmatpush1.bf16.msra.mxu0 0
      %1385 = vmatprep.subr.bf16.mxu0 0
      %1386 = vmatpush1.bf16.msra.mxu0 0
      %1387 = vmatprep.subr.bf16.mxu0 0
      %1388 = vmatpush1.bf16.msra.mxu0 0
      %1389 = vmatprep.subr.bf16.mxu0 0
      %1390 = vmatpush1.bf16.msra.mxu0 0
      %1391 = vmatprep.subr.bf16.mxu0 0
      %1392 = vmatpush1.bf16.msra.mxu0 0
      %1393 = vmatprep.mubr.bf16.mxu0 0
      %1394 = vmatmul.mubr.bf16.gmra.mrb[0].mxu0 %v1359
      %v1395 = vpop.f32.mrb[0].mxu0
      %v1396 = vadd.f32 0.0, %v1395
      %v1397 = vpop.f32.mrb[0].mxu0
      %v1398 = vpop.f32.mrb[0].mxu0
      %v1399 = vadd.f32 0.0, %v1398
      %v1400 = vpop.f32.mrb[0].mxu0
      %1401 = vdwg.mxu0
      %v1402 = vadd.f32 %v1348, %v1396
      %v1403 = vadd.f32 %v1349, %v1399
      %v1404 = vld [vmem:[%s2 + $0x50] sm:$0xf]
      %v1405 = vld [vmem:[%s2 + $0x54] sm:$0xf]
      %v1408 = vunpack.c.l.b16 %v1404
      %v1409 = vunpack.c.l.b16 %v1405
      %v1410 = vpack.c.b16 %v1409, %v1408
      %v1413 = vsel %vm877, %v852, 0
      %1415 = vmatprep.subr.bf16.mxu0 0
      %1416 = vmatpush1.bf16.msra.mxu0 %v1410
      %1417 = vmatprep.subr.bf16.mxu0 0
      %1418 = vmatpush1.bf16.msra.mxu0 0
      %1419 = vmatprep.subr.bf16.mxu0 0
      %1420 = vmatpush1.bf16.msra.mxu0 0
      %1421 = vmatprep.subr.bf16.mxu0 0
      %1422 = vmatpush1.bf16.msra.mxu0 0
      %1423 = vmatprep.subr.bf16.mxu0 0
      %1424 = vmatpush1.bf16.msra.mxu0 0
      %1425 = vmatprep.subr.bf16.mxu0 0
      %1426 = vmatpush1.bf16.msra.mxu0 0
      %1427 = vmatprep.subr.bf16.mxu0 0
      %1428 = vmatpush1.bf16.msra.mxu0 0
      %1429 = vmatprep.subr.bf16.mxu0 0
      %1430 = vmatpush1.bf16.msra.mxu0 0
      %1431 = vmatprep.subr.bf16.mxu0 0
      %1432 = vmatpush1.bf16.msra.mxu0 0
      %1433 = vmatprep.subr.bf16.mxu0 0
      %1434 = vmatpush1.bf16.msra.mxu0 0
      %1435 = vmatprep.subr.bf16.mxu0 0
      %1436 = vmatpush1.bf16.msra.mxu0 0
      %1437 = vmatprep.subr.bf16.mxu0 0
      %1438 = vmatpush1.bf16.msra.mxu0 0
      %1439 = vmatprep.subr.bf16.mxu0 0
      %1440 = vmatpush1.bf16.msra.mxu0 0
      %1441 = vmatprep.subr.bf16.mxu0 0
      %1442 = vmatpush1.bf16.msra.mxu0 0
      %1443 = vmatprep.subr.bf16.mxu0 0
      %1444 = vmatpush1.bf16.msra.mxu0 0
      %1445 = vmatprep.subr.bf16.mxu0 0
      %1446 = vmatpush1.bf16.msra.mxu0 0
      %1447 = vmatprep.mubr.bf16.mxu0 0
      %1448 = vmatmul.mubr.bf16.gmra.mrb[0].mxu0 %v1413
      %v1449 = vpop.f32.mrb[0].mxu0
      %v1450 = vadd.f32 0.0, %v1449
      %v1451 = vpop.f32.mrb[0].mxu0
      %v1452 = vpop.f32.mrb[0].mxu0
      %v1453 = vadd.f32 0.0, %v1452
      %v1454 = vpop.f32.mrb[0].mxu0
      %1455 = vdwg.mxu0
      %v1456 = vadd.f32 %v1402, %v1450
      %v1457 = vadd.f32 %v1403, %v1453
      %v1458 = vld [vmem:[%s2 + $0x58] sm:$0xf]
      %v1459 = vld [vmem:[%s2 + $0x5c] sm:$0xf]
      %v1462 = vunpack.c.l.b16 %v1458
      %v1463 = vunpack.c.l.b16 %v1459
      %v1464 = vpack.c.b16 %v1463, %v1462
      %v1467 = vsel %vm877, %v853, 0
      %1469 = vmatprep.subr.bf16.mxu0 0
      %1470 = vmatpush1.bf16.msra.mxu0 %v1464
      %1471 = vmatprep.subr.bf16.mxu0 0
      %1472 = vmatpush1.bf16.msra.mxu0 0
      %1473 = vmatprep.subr.bf16.mxu0 0
      %1474 = vmatpush1.bf16.msra.mxu0 0
      %1475 = vmatprep.subr.bf16.mxu0 0
      %1476 = vmatpush1.bf16.msra.mxu0 0
      %1477 = vmatprep.subr.bf16.mxu0 0
      %1478 = vmatpush1.bf16.msra.mxu0 0
      %1479 = vmatprep.subr.bf16.mxu0 0
      %1480 = vmatpush1.bf16.msra.mxu0 0
      %1481 = vmatprep.subr.bf16.mxu0 0
      %1482 = vmatpush1.bf16.msra.mxu0 0
      %1483 = vmatprep.subr.bf16.mxu0 0
      %1484 = vmatpush1.bf16.msra.mxu0 0
      %1485 = vmatprep.subr.bf16.mxu0 0
      %1486 = vmatpush1.bf16.msra.mxu0 0
      %1487 = vmatprep.subr.bf16.mxu0 0
      %1488 = vmatpush1.bf16.msra.mxu0 0
      %1489 = vmatprep.subr.bf16.mxu0 0
      %1490 = vmatpush1.bf16.msra.mxu0 0
      %1491 = vmatprep.subr.bf16.mxu0 0
      %1492 = vmatpush1.bf16.msra.mxu0 0
      %1493 = vmatprep.subr.bf16.mxu0 0
      %1494 = vmatpush1.bf16.msra.mxu0 0
      %1495 = vmatprep.subr.bf16.mxu0 0
      %1496 = vmatpush1.bf16.msra.mxu0 0
      %1497 = vmatprep.subr.bf16.mxu0 0
      %1498 = vmatpush1.bf16.msra.mxu0 0
      %1499 = vmatprep.subr.bf16.mxu0 0
      %1500 = vmatpush1.bf16.msra.mxu0 0
      %1501 = vmatprep.mubr.bf16.mxu0 0
      %1502 = vmatmul.mubr.bf16.gmra.mrb[0].mxu0 %v1467
      %v1503 = vpop.f32.mrb[0].mxu0
      %v1504 = vadd.f32 0.0, %v1503
      %v1505 = vpop.f32.mrb[0].mxu0
      %v1506 = vpop.f32.mrb[0].mxu0
      %v1507 = vadd.f32 0.0, %v1506
      %v1508 = vpop.f32.mrb[0].mxu0
      %1509 = vdwg.mxu0
      %v1510 = vadd.f32 %v1456, %v1504
      %v1511 = vadd.f32 %v1457, %v1507
      %v1512 = vld [vmem:[%s2 + $0x60] sm:$0xf]
      %v1513 = vld [vmem:[%s2 + $0x64] sm:$0xf]
      %v1516 = vunpack.c.l.b16 %v1512
      %v1517 = vunpack.c.l.b16 %v1513
      %v1518 = vpack.c.b16 %v1517, %v1516
      %v1521 = vsel %vm877, %v854, 0
      %1523 = vmatprep.subr.bf16.mxu0 0
      %1524 = vmatpush1.bf16.msra.mxu0 %v1518
      %1525 = vmatprep.subr.bf16.mxu0 0
      %1526 = vmatpush1.bf16.msra.mxu0 0
      %1527 = vmatprep.subr.bf16.mxu0 0
      %1528 = vmatpush1.bf16.msra.mxu0 0
      %1529 = vmatprep.subr.bf16.mxu0 0
      %1530 = vmatpush1.bf16.msra.mxu0 0
      %1531 = vmatprep.subr.bf16.mxu0 0
      %1532 = vmatpush1.bf16.msra.mxu0 0
      %1533 = vmatprep.subr.bf16.mxu0 0
      %1534 = vmatpush1.bf16.msra.mxu0 0
      %1535 = vmatprep.subr.bf16.mxu0 0
      %1536 = vmatpush1.bf16.msra.mxu0 0
      %1537 = vmatprep.subr.bf16.mxu0 0
      %1538 = vmatpush1.bf16.msra.mxu0 0
      %1539 = vmatprep.subr.bf16.mxu0 0
      %1540 = vmatpush1.bf16.msra.mxu0 0
      %1541 = vmatprep.subr.bf16.mxu0 0
      %1542 = vmatpush1.bf16.msra.mxu0 0
      %1543 = vmatprep.subr.bf16.mxu0 0
      %1544 = vmatpush1.bf16.msra.mxu0 0
      %1545 = vmatprep.subr.bf16.mxu0 0
      %1546 = vmatpush1.bf16.msra.mxu0 0
      %1547 = vmatprep.subr.bf16.mxu0 0
      %1548 = vmatpush1.bf16.msra.mxu0 0
      %1549 = vmatprep.subr.bf16.mxu0 0
      %1550 = vmatpush1.bf16.msra.mxu0 0
      %1551 = vmatprep.subr.bf16.mxu0 0
      %1552 = vmatpush1.bf16.msra.mxu0 0
      %1553 = vmatprep.subr.bf16.mxu0 0
      %1554 = vmatpush1.bf16.msra.mxu0 0
      %1555 = vmatprep.mubr.bf16.mxu0 0
      %1556 = vmatmul.mubr.bf16.gmra.mrb[0].mxu0 %v1521
      %v1557 = vpop.f32.mrb[0].mxu0
      %v1558 = vadd.f32 0.0, %v1557
      %v1559 = vpop.f32.mrb[0].mxu0
      %v1560 = vpop.f32.mrb[0].mxu0
      %v1561 = vadd.f32 0.0, %v1560
      %v1562 = vpop.f32.mrb[0].mxu0
      %1563 = vdwg.mxu0
      %v1564 = vadd.f32 %v1510, %v1558
      %v1565 = vadd.f32 %v1511, %v1561
      %v1566 = vld [vmem:[%s2 + $0x68] sm:$0xf]
      %v1567 = vld [vmem:[%s2 + $0x6c] sm:$0xf]
      %v1570 = vunpack.c.l.b16 %v1566
      %v1571 = vunpack.c.l.b16 %v1567
      %v1572 = vpack.c.b16 %v1571, %v1570
      %v1575 = vsel %vm877, %v855, 0
      %1577 = vmatprep.subr.bf16.mxu0 0
      %1578 = vmatpush1.bf16.msra.mxu0 %v1572
      %1579 = vmatprep.subr.bf16.mxu0 0
      %1580 = vmatpush1.bf16.msra.mxu0 0
      %1581 = vmatprep.subr.bf16.mxu0 0
      %1582 = vmatpush1.bf16.msra.mxu0 0
      %1583 = vmatprep.subr.bf16.mxu0 0
      %1584 = vmatpush1.bf16.msra.mxu0 0
      %1585 = vmatprep.subr.bf16.mxu0 0
      %1586 = vmatpush1.bf16.msra.mxu0 0
      %1587 = vmatprep.subr.bf16.mxu0 0
      %1588 = vmatpush1.bf16.msra.mxu0 0
      %1589 = vmatprep.subr.bf16.mxu0 0
      %1590 = vmatpush1.bf16.msra.mxu0 0
      %1591 = vmatprep.subr.bf16.mxu0 0
      %1592 = vmatpush1.bf16.msra.mxu0 0
      %1593 = vmatprep.subr.bf16.mxu0 0
      %1594 = vmatpush1.bf16.msra.mxu0 0
      %1595 = vmatprep.subr.bf16.mxu0 0
      %1596 = vmatpush1.bf16.msra.mxu0 0
      %1597 = vmatprep.subr.bf16.mxu0 0
      %1598 = vmatpush1.bf16.msra.mxu0 0
      %1599 = vmatprep.subr.bf16.mxu0 0
      %1600 = vmatpush1.bf16.msra.mxu0 0
      %1601 = vmatprep.subr.bf16.mxu0 0
      %1602 = vmatpush1.bf16.msra.mxu0 0
      %1603 = vmatprep.subr.bf16.mxu0 0
      %1604 = vmatpush1.bf16.msra.mxu0 0
      %1605 = vmatprep.subr.bf16.mxu0 0
      %1606 = vmatpush1.bf16.msra.mxu0 0
      %1607 = vmatprep.subr.bf16.mxu0 0
      %1608 = vmatpush1.bf16.msra.mxu0 0
      %1609 = vmatprep.mubr.bf16.mxu0 0
      %1610 = vmatmul.mubr.bf16.gmra.mrb[0].mxu0 %v1575
      %v1611 = vpop.f32.mrb[0].mxu0
      %v1612 = vadd.f32 0.0, %v1611
      %v1613 = vpop.f32.mrb[0].mxu0
      %v1614 = vpop.f32.mrb[0].mxu0
      %v1615 = vadd.f32 0.0, %v1614
      %v1616 = vpop.f32.mrb[0].mxu0
      %1617 = vdwg.mxu0
      %v1618 = vadd.f32 %v1564, %v1612
      %v1619 = vadd.f32 %v1565, %v1615
      %v1620 = vld [vmem:[%s2 + $0x70] sm:$0xf]
      %v1621 = vld [vmem:[%s2 + $0x74] sm:$0xf]
      %v1624 = vunpack.c.l.b16 %v1620
      %v1625 = vunpack.c.l.b16 %v1621
      %v1626 = vpack.c.b16 %v1625, %v1624
      %v1629 = vsel %vm877, %v856, 0
      %1631 = vmatprep.subr.bf16.mxu0 0
      %1632 = vmatpush1.bf16.msra.mxu0 %v1626
      %1633 = vmatprep.subr.bf16.mxu0 0
      %1634 = vmatpush1.bf16.msra.mxu0 0
      %1635 = vmatprep.subr.bf16.mxu0 0
      %1636 = vmatpush1.bf16.msra.mxu0 0
      %1637 = vmatprep.subr.bf16.mxu0 0
      %1638 = vmatpush1.bf16.msra.mxu0 0
      %1639 = vmatprep.subr.bf16.mxu0 0
      %1640 = vmatpush1.bf16.msra.mxu0 0
      %1641 = vmatprep.subr.bf16.mxu0 0
      %1642 = vmatpush1.bf16.msra.mxu0 0
      %1643 = vmatprep.subr.bf16.mxu0 0
      %1644 = vmatpush1.bf16.msra.mxu0 0
      %1645 = vmatprep.subr.bf16.mxu0 0
      %1646 = vmatpush1.bf16.msra.mxu0 0
      %1647 = vmatprep.subr.bf16.mxu0 0
      %1648 = vmatpush1.bf16.msra.mxu0 0
      %1649 = vmatprep.subr.bf16.mxu0 0
      %1650 = vmatpush1.bf16.msra.mxu0 0
      %1651 = vmatprep.subr.bf16.mxu0 0
      %1652 = vmatpush1.bf16.msra.mxu0 0
      %1653 = vmatprep.subr.bf16.mxu0 0
      %1654 = vmatpush1.bf16.msra.mxu0 0
      %1655 = vmatprep.subr.bf16.mxu0 0
      %1656 = vmatpush1.bf16.msra.mxu0 0
      %1657 = vmatprep.subr.bf16.mxu0 0
      %1658 = vmatpush1.bf16.msra.mxu0 0
      %1659 = vmatprep.subr.bf16.mxu0 0
      %1660 = vmatpush1.bf16.msra.mxu0 0
      %1661 = vmatprep.subr.bf16.mxu0 0
      %1662 = vmatpush1.bf16.msra.mxu0 0
      %1663 = vmatprep.mubr.bf16.mxu0 0
      %1664 = vmatmul.mubr.bf16.gmra.mrb[0].mxu0 %v1629
      %v1665 = vpop.f32.mrb[0].mxu0
      %v1666 = vadd.f32 0.0, %v1665
      %v1667 = vpop.f32.mrb[0].mxu0
      %v1668 = vpop.f32.mrb[0].mxu0
      %v1669 = vadd.f32 0.0, %v1668
      %v1670 = vpop.f32.mrb[0].mxu0
      %1671 = vdwg.mxu0
      %v1672 = vadd.f32 %v1618, %v1666
      %v1673 = vadd.f32 %v1619, %v1669
      %v1674 = vld [vmem:[%s2 + $0x78] sm:$0xf]
      %v1675 = vld [vmem:[%s2 + $0x7c] sm:$0xf]
      %v1678 = vunpack.c.l.b16 %v1674
      %v1679 = vunpack.c.l.b16 %v1675
      %v1680 = vpack.c.b16 %v1679, %v1678
      %v1683 = vsel %vm877, %v857, 0
      %1685 = vmatprep.subr.bf16.mxu0 0
      %1686 = vmatpush1.bf16.msra.mxu0 %v1680
      %1687 = vmatprep.subr.bf16.mxu0 0
      %1688 = vmatpush1.bf16.msra.mxu0 0
      %1689 = vmatprep.subr.bf16.mxu0 0
      %1690 = vmatpush1.bf16.msra.mxu0 0
      %1691 = vmatprep.subr.bf16.mxu0 0
      %1692 = vmatpush1.bf16.msra.mxu0 0
      %1693 = vmatprep.subr.bf16.mxu0 0
      %1694 = vmatpush1.bf16.msra.mxu0 0
      %1695 = vmatprep.subr.bf16.mxu0 0
      %1696 = vmatpush1.bf16.msra.mxu0 0
      %1697 = vmatprep.subr.bf16.mxu0 0
      %1698 = vmatpush1.bf16.msra.mxu0 0
      %1699 = vmatprep.subr.bf16.mxu0 0
      %1700 = vmatpush1.bf16.msra.mxu0 0
      %1701 = vmatprep.subr.bf16.mxu0 0
      %1702 = vmatpush1.bf16.msra.mxu0 0
      %1703 = vmatprep.subr.bf16.mxu0 0
      %1704 = vmatpush1.bf16.msra.mxu0 0
      %1705 = vmatprep.subr.bf16.mxu0 0
      %1706 = vmatpush1.bf16.msra.mxu0 0
      %1707 = vmatprep.subr.bf16.mxu0 0
      %1708 = vmatpush1.bf16.msra.mxu0 0
      %1709 = vmatprep.subr.bf16.mxu0 0
      %1710 = vmatpush1.bf16.msra.mxu0 0
      %1711 = vmatprep.subr.bf16.mxu0 0
      %1712 = vmatpush1.bf16.msra.mxu0 0
      %1713 = vmatprep.subr.bf16.mxu0 0
      %1714 = vmatpush1.bf16.msra.mxu0 0
      %1715 = vmatprep.subr.bf16.mxu0 0
      %1716 = vmatpush1.bf16.msra.mxu0 0
      %1717 = vmatprep.mubr.bf16.mxu0 0
      %1718 = vmatmul.mubr.bf16.gmra.mrb[0].mxu0 %v1683
      %v1719 = vpop.f32.mrb[0].mxu0
      %v1720 = vadd.f32 0.0, %v1719
      %v1721 = vpop.f32.mrb[0].mxu0
      %v1722 = vpop.f32.mrb[0].mxu0
      %v1723 = vadd.f32 0.0, %v1722
      %v1724 = vpop.f32.mrb[0].mxu0
      %1725 = vdwg.mxu0
      %v1726 = vadd.f32 %v1672, %v1720
      %v1727 = vadd.f32 %v1673, %v1723
      %v1728 = vld [vmem:[%s2 + $0x80] sm:$0xf]
      %v1729 = vld [vmem:[%s2 + $0x84] sm:$0xf]
      %v1732 = vunpack.c.l.b16 %v1728
      %v1733 = vunpack.c.l.b16 %v1729
      %v1734 = vpack.c.b16 %v1733, %v1732
      %v1737 = vsel %vm877, %v858, 0
      %1739 = vmatprep.subr.bf16.mxu0 0
      %1740 = vmatpush1.bf16.msra.mxu0 %v1734
      %1741 = vmatprep.subr.bf16.mxu0 0
      %1742 = vmatpush1.bf16.msra.mxu0 0
      %1743 = vmatprep.subr.bf16.mxu0 0
      %1744 = vmatpush1.bf16.msra.mxu0 0
      %1745 = vmatprep.subr.bf16.mxu0 0
      %1746 = vmatpush1.bf16.msra.mxu0 0
      %1747 = vmatprep.subr.bf16.mxu0 0
      %1748 = vmatpush1.bf16.msra.mxu0 0
      %1749 = vmatprep.subr.bf16.mxu0 0
      %1750 = vmatpush1.bf16.msra.mxu0 0
      %1751 = vmatprep.subr.bf16.mxu0 0
      %1752 = vmatpush1.bf16.msra.mxu0 0
      %1753 = vmatprep.subr.bf16.mxu0 0
      %1754 = vmatpush1.bf16.msra.mxu0 0
      %1755 = vmatprep.subr.bf16.mxu0 0
      %1756 = vmatpush1.bf16.msra.mxu0 0
      %1757 = vmatprep.subr.bf16.mxu0 0
      %1758 = vmatpush1.bf16.msra.mxu0 0
      %1759 = vmatprep.subr.bf16.mxu0 0
      %1760 = vmatpush1.bf16.msra.mxu0 0
      %1761 = vmatprep.subr.bf16.mxu0 0
      %1762 = vmatpush1.bf16.msra.mxu0 0
      %1763 = vmatprep.subr.bf16.mxu0 0
      %1764 = vmatpush1.bf16.msra.mxu0 0
      %1765 = vmatprep.subr.bf16.mxu0 0
      %1766 = vmatpush1.bf16.msra.mxu0 0
      %1767 = vmatprep.subr.bf16.mxu0 0
      %1768 = vmatpush1.bf16.msra.mxu0 0
      %1769 = vmatprep.subr.bf16.mxu0 0
      %1770 = vmatpush1.bf16.msra.mxu0 0
      %1771 = vmatprep.mubr.bf16.mxu0 0
      %1772 = vmatmul.mubr.bf16.gmra.mrb[0].mxu0 %v1737
      %v1773 = vpop.f32.mrb[0].mxu0
      %v1774 = vadd.f32 0.0, %v1773
      %v1775 = vpop.f32.mrb[0].mxu0
      %v1776 = vpop.f32.mrb[0].mxu0
      %v1777 = vadd.f32 0.0, %v1776
      %v1778 = vpop.f32.mrb[0].mxu0
      %1779 = vdwg.mxu0
      %v1780 = vadd.f32 %v1726, %v1774
      %v1781 = vadd.f32 %v1727, %v1777
      %v1782 = vld [vmem:[%s2 + $0x88] sm:$0xf]
      %v1783 = vld [vmem:[%s2 + $0x8c] sm:$0xf]
      %v1786 = vunpack.c.l.b16 %v1782
      %v1787 = vunpack.c.l.b16 %v1783
      %v1788 = vpack.c.b16 %v1787, %v1786
      %v1791 = vsel %vm877, %v859, 0
      %1793 = vmatprep.subr.bf16.mxu0 0
      %1794 = vmatpush1.bf16.msra.mxu0 %v1788
      %1795 = vmatprep.subr.bf16.mxu0 0
      %1796 = vmatpush1.bf16.msra.mxu0 0
      %1797 = vmatprep.subr.bf16.mxu0 0
      %1798 = vmatpush1.bf16.msra.mxu0 0
      %1799 = vmatprep.subr.bf16.mxu0 0
      %1800 = vmatpush1.bf16.msra.mxu0 0
      %1801 = vmatprep.subr.bf16.mxu0 0
      %1802 = vmatpush1.bf16.msra.mxu0 0
      %1803 = vmatprep.subr.bf16.mxu0 0
      %1804 = vmatpush1.bf16.msra.mxu0 0
      %1805 = vmatprep.subr.bf16.mxu0 0
      %1806 = vmatpush1.bf16.msra.mxu0 0
      %1807 = vmatprep.subr.bf16.mxu0 0
      %1808 = vmatpush1.bf16.msra.mxu0 0
      %1809 = vmatprep.subr.bf16.mxu0 0
      %1810 = vmatpush1.bf16.msra.mxu0 0
      %1811 = vmatprep.subr.bf16.mxu0 0
      %1812 = vmatpush1.bf16.msra.mxu0 0
      %1813 = vmatprep.subr.bf16.mxu0 0
      %1814 = vmatpush1.bf16.msra.mxu0 0
      %1815 = vmatprep.subr.bf16.mxu0 0
      %1816 = vmatpush1.bf16.msra.mxu0 0
      %1817 = vmatprep.subr.bf16.mxu0 0
      %1818 = vmatpush1.bf16.msra.mxu0 0
      %1819 = vmatprep.subr.bf16.mxu0 0
      %1820 = vmatpush1.bf16.msra.mxu0 0
      %1821 = vmatprep.subr.bf16.mxu0 0
      %1822 = vmatpush1.bf16.msra.mxu0 0
      %1823 = vmatprep.subr.bf16.mxu0 0
      %1824 = vmatpush1.bf16.msra.mxu0 0
      %1825 = vmatprep.mubr.bf16.mxu0 0
      %1826 = vmatmul.mubr.bf16.gmra.mrb[0].mxu0 %v1791
      %v1827 = vpop.f32.mrb[0].mxu0
      %v1828 = vadd.f32 0.0, %v1827
      %v1829 = vpop.f32.mrb[0].mxu0
      %v1830 = vpop.f32.mrb[0].mxu0
      %v1831 = vadd.f32 0.0, %v1830
      %v1832 = vpop.f32.mrb[0].mxu0
      %1833 = vdwg.mxu0
      %v1834 = vadd.f32 %v1780, %v1828
      %v1835 = vadd.f32 %v1781, %v1831
      %v1836 = vld [vmem:[%s2 + $0x90] sm:$0xf]
      %v1837 = vld [vmem:[%s2 + $0x94] sm:$0xf]
      %v1840 = vunpack.c.l.b16 %v1836
      %v1841 = vunpack.c.l.b16 %v1837
      %v1842 = vpack.c.b16 %v1841, %v1840
      %v1845 = vsel %vm877, %v860, 0
      %1847 = vmatprep.subr.bf16.mxu0 0
      %1848 = vmatpush1.bf16.msra.mxu0 %v1842
      %1849 = vmatprep.subr.bf16.mxu0 0
      %1850 = vmatpush1.bf16.msra.mxu0 0
      %1851 = vmatprep.subr.bf16.mxu0 0
      %1852 = vmatpush1.bf16.msra.mxu0 0
      %1853 = vmatprep.subr.bf16.mxu0 0
      %1854 = vmatpush1.bf16.msra.mxu0 0
      %1855 = vmatprep.subr.bf16.mxu0 0
      %1856 = vmatpush1.bf16.msra.mxu0 0
      %1857 = vmatprep.subr.bf16.mxu0 0
      %1858 = vmatpush1.bf16.msra.mxu0 0
      %1859 = vmatprep.subr.bf16.mxu0 0
      %1860 = vmatpush1.bf16.msra.mxu0 0
      %1861 = vmatprep.subr.bf16.mxu0 0
      %1862 = vmatpush1.bf16.msra.mxu0 0
      %1863 = vmatprep.subr.bf16.mxu0 0
      %1864 = vmatpush1.bf16.msra.mxu0 0
      %1865 = vmatprep.subr.bf16.mxu0 0
      %1866 = vmatpush1.bf16.msra.mxu0 0
      %1867 = vmatprep.subr.bf16.mxu0 0
      %1868 = vmatpush1.bf16.msra.mxu0 0
      %1869 = vmatprep.subr.bf16.mxu0 0
      %1870 = vmatpush1.bf16.msra.mxu0 0
      %1871 = vmatprep.subr.bf16.mxu0 0
      %1872 = vmatpush1.bf16.msra.mxu0 0
      %1873 = vmatprep.subr.bf16.mxu0 0
      %1874 = vmatpush1.bf16.msra.mxu0 0
      %1875 = vmatprep.subr.bf16.mxu0 0
      %1876 = vmatpush1.bf16.msra.mxu0 0
      %1877 = vmatprep.subr.bf16.mxu0 0
      %1878 = vmatpush1.bf16.msra.mxu0 0
      %1879 = vmatprep.mubr.bf16.mxu0 0
      %1880 = vmatmul.mubr.bf16.gmra.mrb[0].mxu0 %v1845
      %v1881 = vpop.f32.mrb[0].mxu0
      %v1882 = vadd.f32 0.0, %v1881
      %v1883 = vpop.f32.mrb[0].mxu0
      %v1884 = vpop.f32.mrb[0].mxu0
      %v1885 = vadd.f32 0.0, %v1884
      %v1886 = vpop.f32.mrb[0].mxu0
      %1887 = vdwg.mxu0
      %v1888 = vadd.f32 %v1834, %v1882
      %v1889 = vadd.f32 %v1835, %v1885
      %v1890 = vld [vmem:[%s2 + $0x98] sm:$0xf]
      %v1891 = vld [vmem:[%s2 + $0x9c] sm:$0xf]
      %v1894 = vunpack.c.l.b16 %v1890
      %v1895 = vunpack.c.l.b16 %v1891
      %v1896 = vpack.c.b16 %v1895, %v1894
      %v1899 = vsel %vm877, %v861, 0
      %1901 = vmatprep.subr.bf16.mxu0 0
      %1902 = vmatpush1.bf16.msra.mxu0 %v1896
      %1903 = vmatprep.subr.bf16.mxu0 0
      %1904 = vmatpush1.bf16.msra.mxu0 0
      %1905 = vmatprep.subr.bf16.mxu0 0
      %1906 = vmatpush1.bf16.msra.mxu0 0
      %1907 = vmatprep.subr.bf16.mxu0 0
      %1908 = vmatpush1.bf16.msra.mxu0 0
      %1909 = vmatprep.subr.bf16.mxu0 0
      %1910 = vmatpush1.bf16.msra.mxu0 0
      %1911 = vmatprep.subr.bf16.mxu0 0
      %1912 = vmatpush1.bf16.msra.mxu0 0
      %1913 = vmatprep.subr.bf16.mxu0 0
      %1914 = vmatpush1.bf16.msra.mxu0 0
      %1915 = vmatprep.subr.bf16.mxu0 0
      %1916 = vmatpush1.bf16.msra.mxu0 0
      %1917 = vmatprep.subr.bf16.mxu0 0
      %1918 = vmatpush1.bf16.msra.mxu0 0
      %1919 = vmatprep.subr.bf16.mxu0 0
      %1920 = vmatpush1.bf16.msra.mxu0 0
      %1921 = vmatprep.subr.bf16.mxu0 0
      %1922 = vmatpush1.bf16.msra.mxu0 0
      %1923 = vmatprep.subr.bf16.mxu0 0
      %1924 = vmatpush1.bf16.msra.mxu0 0
      %1925 = vmatprep.subr.bf16.mxu0 0
      %1926 = vmatpush1.bf16.msra.mxu0 0
      %1927 = vmatprep.subr.bf16.mxu0 0
      %1928 = vmatpush1.bf16.msra.mxu0 0
      %1929 = vmatprep.subr.bf16.mxu0 0
      %1930 = vmatpush1.bf16.msra.mxu0 0
      %1931 = vmatprep.subr.bf16.mxu0 0
      %1932 = vmatpush1.bf16.msra.mxu0 0
      %1933 = vmatprep.mubr.bf16.mxu0 0
      %1934 = vmatmul.mubr.bf16.gmra.mrb[0].mxu0 %v1899
      %v1935 = vpop.f32.mrb[0].mxu0
      %v1936 = vadd.f32 0.0, %v1935
      %v1937 = vpop.f32.mrb[0].mxu0
      %v1938 = vpop.f32.mrb[0].mxu0
      %v1939 = vadd.f32 0.0, %v1938
      %v1940 = vpop.f32.mrb[0].mxu0
      %1941 = vdwg.mxu0
      %v1942 = vadd.f32 %v1888, %v1936
      %v1943 = vadd.f32 %v1889, %v1939
      %v1944 = vld [vmem:[%s2 + $0xa0] sm:$0xf]
      %v1945 = vld [vmem:[%s2 + $0xa4] sm:$0xf]
      %v1948 = vunpack.c.l.b16 %v1944
      %v1949 = vunpack.c.l.b16 %v1945
      %v1950 = vpack.c.b16 %v1949, %v1948
      %v1953 = vsel %vm877, %v862, 0
      %1955 = vmatprep.subr.bf16.mxu0 0
      %1956 = vmatpush1.bf16.msra.mxu0 %v1950
      %1957 = vmatprep.subr.bf16.mxu0 0
      %1958 = vmatpush1.bf16.msra.mxu0 0
      %1959 = vmatprep.subr.bf16.mxu0 0
      %1960 = vmatpush1.bf16.msra.mxu0 0
      %1961 = vmatprep.subr.bf16.mxu0 0
      %1962 = vmatpush1.bf16.msra.mxu0 0
      %1963 = vmatprep.subr.bf16.mxu0 0
      %1964 = vmatpush1.bf16.msra.mxu0 0
      %1965 = vmatprep.subr.bf16.mxu0 0
      %1966 = vmatpush1.bf16.msra.mxu0 0
      %1967 = vmatprep.subr.bf16.mxu0 0
      %1968 = vmatpush1.bf16.msra.mxu0 0
      %1969 = vmatprep.subr.bf16.mxu0 0
      %1970 = vmatpush1.bf16.msra.mxu0 0
      %1971 = vmatprep.subr.bf16.mxu0 0
      %1972 = vmatpush1.bf16.msra.mxu0 0
      %1973 = vmatprep.subr.bf16.mxu0 0
      %1974 = vmatpush1.bf16.msra.mxu0 0
      %1975 = vmatprep.subr.bf16.mxu0 0
      %1976 = vmatpush1.bf16.msra.mxu0 0
      %1977 = vmatprep.subr.bf16.mxu0 0
      %1978 = vmatpush1.bf16.msra.mxu0 0
      %1979 = vmatprep.subr.bf16.mxu0 0
      %1980 = vmatpush1.bf16.msra.mxu0 0
      %1981 = vmatprep.subr.bf16.mxu0 0
      %1982 = vmatpush1.bf16.msra.mxu0 0
      %1983 = vmatprep.subr.bf16.mxu0 0
      %1984 = vmatpush1.bf16.msra.mxu0 0
      %1985 = vmatprep.subr.bf16.mxu0 0
      %1986 = vmatpush1.bf16.msra.mxu0 0
      %1987 = vmatprep.mubr.bf16.mxu0 0
      %1988 = vmatmul.mubr.bf16.gmra.mrb[0].mxu0 %v1953
      %v1989 = vpop.f32.mrb[0].mxu0
      %v1990 = vadd.f32 0.0, %v1989
      %v1991 = vpop.f32.mrb[0].mxu0
      %v1992 = vpop.f32.mrb[0].mxu0
      %v1993 = vadd.f32 0.0, %v1992
      %v1994 = vpop.f32.mrb[0].mxu0
      %1995 = vdwg.mxu0
      %v1996 = vadd.f32 %v1942, %v1990
      %v1997 = vadd.f32 %v1943, %v1993
      %v1998 = vld [vmem:[%s2 + $0xa8] sm:$0xf]
      %v1999 = vld [vmem:[%s2 + $0xac] sm:$0xf]
      %v2002 = vunpack.c.l.b16 %v1998
      %v2003 = vunpack.c.l.b16 %v1999
      %v2004 = vpack.c.b16 %v2003, %v2002
      %v2007 = vsel %vm877, %v863, 0
      %2009 = vmatprep.subr.bf16.mxu0 0
      %2010 = vmatpush1.bf16.msra.mxu0 %v2004
      %2011 = vmatprep.subr.bf16.mxu0 0
      %2012 = vmatpush1.bf16.msra.mxu0 0
      %2013 = vmatprep.subr.bf16.mxu0 0
      %2014 = vmatpush1.bf16.msra.mxu0 0
      %2015 = vmatprep.subr.bf16.mxu0 0
      %2016 = vmatpush1.bf16.msra.mxu0 0
      %2017 = vmatprep.subr.bf16.mxu0 0
      %2018 = vmatpush1.bf16.msra.mxu0 0
      %2019 = vmatprep.subr.bf16.mxu0 0
      %2020 = vmatpush1.bf16.msra.mxu0 0
      %2021 = vmatprep.subr.bf16.mxu0 0
      %2022 = vmatpush1.bf16.msra.mxu0 0
      %2023 = vmatprep.subr.bf16.mxu0 0
      %2024 = vmatpush1.bf16.msra.mxu0 0
      %2025 = vmatprep.subr.bf16.mxu0 0
      %2026 = vmatpush1.bf16.msra.mxu0 0
      %2027 = vmatprep.subr.bf16.mxu0 0
      %2028 = vmatpush1.bf16.msra.mxu0 0
      %2029 = vmatprep.subr.bf16.mxu0 0
      %2030 = vmatpush1.bf16.msra.mxu0 0
      %2031 = vmatprep.subr.bf16.mxu0 0
      %2032 = vmatpush1.bf16.msra.mxu0 0
      %2033 = vmatprep.subr.bf16.mxu0 0
      %2034 = vmatpush1.bf16.msra.mxu0 0
      %2035 = vmatprep.subr.bf16.mxu0 0
      %2036 = vmatpush1.bf16.msra.mxu0 0
      %2037 = vmatprep.subr.bf16.mxu0 0
      %2038 = vmatpush1.bf16.msra.mxu0 0
      %2039 = vmatprep.subr.bf16.mxu0 0
      %2040 = vmatpush1.bf16.msra.mxu0 0
      %2041 = vmatprep.mubr.bf16.mxu0 0
      %2042 = vmatmul.mubr.bf16.gmra.mrb[0].mxu0 %v2007
      %v2043 = vpop.f32.mrb[0].mxu0
      %v2044 = vadd.f32 0.0, %v2043
      %v2045 = vpop.f32.mrb[0].mxu0
      %v2046 = vpop.f32.mrb[0].mxu0
      %v2047 = vadd.f32 0.0, %v2046
      %v2048 = vpop.f32.mrb[0].mxu0
      %2049 = vdwg.mxu0
      %v2050 = vadd.f32 %v1996, %v2044
      %v2051 = vadd.f32 %v1997, %v2047
      %v2052 = vld [vmem:[%s2 + $0xb0] sm:$0xf]
      %v2053 = vld [vmem:[%s2 + $0xb4] sm:$0xf]
      %v2056 = vunpack.c.l.b16 %v2052
      %v2057 = vunpack.c.l.b16 %v2053
      %v2058 = vpack.c.b16 %v2057, %v2056
      %v2061 = vsel %vm877, %v864, 0
      %2063 = vmatprep.subr.bf16.mxu0 0
      %2064 = vmatpush1.bf16.msra.mxu0 %v2058
      %2065 = vmatprep.subr.bf16.mxu0 0
      %2066 = vmatpush1.bf16.msra.mxu0 0
      %2067 = vmatprep.subr.bf16.mxu0 0
      %2068 = vmatpush1.bf16.msra.mxu0 0
      %2069 = vmatprep.subr.bf16.mxu0 0
      %2070 = vmatpush1.bf16.msra.mxu0 0
      %2071 = vmatprep.subr.bf16.mxu0 0
      %2072 = vmatpush1.bf16.msra.mxu0 0
      %2073 = vmatprep.subr.bf16.mxu0 0
      %2074 = vmatpush1.bf16.msra.mxu0 0
      %2075 = vmatprep.subr.bf16.mxu0 0
      %2076 = vmatpush1.bf16.msra.mxu0 0
      %2077 = vmatprep.subr.bf16.mxu0 0
      %2078 = vmatpush1.bf16.msra.mxu0 0
      %2079 = vmatprep.subr.bf16.mxu0 0
      %2080 = vmatpush1.bf16.msra.mxu0 0
      %2081 = vmatprep.subr.bf16.mxu0 0
      %2082 = vmatpush1.bf16.msra.mxu0 0
      %2083 = vmatprep.subr.bf16.mxu0 0
      %2084 = vmatpush1.bf16.msra.mxu0 0
      %2085 = vmatprep.subr.bf16.mxu0 0
      %2086 = vmatpush1.bf16.msra.mxu0 0
      %2087 = vmatprep.subr.bf16.mxu0 0
      %2088 = vmatpush1.bf16.msra.mxu0 0
      %2089 = vmatprep.subr.bf16.mxu0 0
      %2090 = vmatpush1.bf16.msra.mxu0 0
      %2091 = vmatprep.subr.bf16.mxu0 0
      %2092 = vmatpush1.bf16.msra.mxu0 0
      %2093 = vmatprep.subr.bf16.mxu0 0
      %2094 = vmatpush1.bf16.msra.mxu0 0
      %2095 = vmatprep.mubr.bf16.mxu0 0
      %2096 = vmatmul.mubr.bf16.gmra.mrb[0].mxu0 %v2061
      %v2097 = vpop.f32.mrb[0].mxu0
      %v2098 = vadd.f32 0.0, %v2097
      %v2099 = vpop.f32.mrb[0].mxu0
      %v2100 = vpop.f32.mrb[0].mxu0
      %v2101 = vadd.f32 0.0, %v2100
      %v2102 = vpop.f32.mrb[0].mxu0
      %2103 = vdwg.mxu0
      %v2104 = vadd.f32 %v2050, %v2098
      %v2105 = vadd.f32 %v2051, %v2101
      %v2106 = vld [vmem:[%s2 + $0xb8] sm:$0xf]
      %v2107 = vld [vmem:[%s2 + $0xbc] sm:$0xf]
      %v2110 = vunpack.c.l.b16 %v2106
      %v2111 = vunpack.c.l.b16 %v2107
      %v2112 = vpack.c.b16 %v2111, %v2110
      %v2115 = vsel %vm877, %v865, 0
      %2117 = vmatprep.subr.bf16.mxu0 0
      %2118 = vmatpush1.bf16.msra.mxu0 %v2112
      %2119 = vmatprep.subr.bf16.mxu0 0
      %2120 = vmatpush1.bf16.msra.mxu0 0
      %2121 = vmatprep.subr.bf16.mxu0 0
      %2122 = vmatpush1.bf16.msra.mxu0 0
      %2123 = vmatprep.subr.bf16.mxu0 0
      %2124 = vmatpush1.bf16.msra.mxu0 0
      %2125 = vmatprep.subr.bf16.mxu0 0
      %2126 = vmatpush1.bf16.msra.mxu0 0
      %2127 = vmatprep.subr.bf16.mxu0 0
      %2128 = vmatpush1.bf16.msra.mxu0 0
      %2129 = vmatprep.subr.bf16.mxu0 0
      %2130 = vmatpush1.bf16.msra.mxu0 0
      %2131 = vmatprep.subr.bf16.mxu0 0
      %2132 = vmatpush1.bf16.msra.mxu0 0
      %2133 = vmatprep.subr.bf16.mxu0 0
      %2134 = vmatpush1.bf16.msra.mxu0 0
      %2135 = vmatprep.subr.bf16.mxu0 0
      %2136 = vmatpush1.bf16.msra.mxu0 0
      %2137 = vmatprep.subr.bf16.mxu0 0
      %2138 = vmatpush1.bf16.msra.mxu0 0
      %2139 = vmatprep.subr.bf16.mxu0 0
      %2140 = vmatpush1.bf16.msra.mxu0 0
      %2141 = vmatprep.subr.bf16.mxu0 0
      %2142 = vmatpush1.bf16.msra.mxu0 0
      %2143 = vmatprep.subr.bf16.mxu0 0
      %2144 = vmatpush1.bf16.msra.mxu0 0
      %2145 = vmatprep.subr.bf16.mxu0 0
      %2146 = vmatpush1.bf16.msra.mxu0 0
      %2147 = vmatprep.subr.bf16.mxu0 0
      %2148 = vmatpush1.bf16.msra.mxu0 0
      %2149 = vmatprep.mubr.bf16.mxu0 0
      %2150 = vmatmul.mubr.bf16.gmra.mrb[0].mxu0 %v2115
      %v2151 = vpop.f32.mrb[0].mxu0
      %v2152 = vadd.f32 0.0, %v2151
      %v2153 = vpop.f32.mrb[0].mxu0
      %v2154 = vpop.f32.mrb[0].mxu0
      %v2155 = vadd.f32 0.0, %v2154
      %v2156 = vpop.f32.mrb[0].mxu0
      %2157 = vdwg.mxu0
      %v2158 = vadd.f32 %v2104, %v2152
      %v2159 = vadd.f32 %v2105, %v2155
      %v2160 = vld [vmem:[%s2 + $0xc0] sm:$0xf]
      %v2161 = vld [vmem:[%s2 + $0xc4] sm:$0xf]
      %v2164 = vunpack.c.l.b16 %v2160
      %v2165 = vunpack.c.l.b16 %v2161
      %v2166 = vpack.c.b16 %v2165, %v2164
      %v2169 = vsel %vm877, %v866, 0
      %2171 = vmatprep.subr.bf16.mxu0 0
      %2172 = vmatpush1.bf16.msra.mxu0 %v2166
      %2173 = vmatprep.subr.bf16.mxu0 0
      %2174 = vmatpush1.bf16.msra.mxu0 0
      %2175 = vmatprep.subr.bf16.mxu0 0
      %2176 = vmatpush1.bf16.msra.mxu0 0
      %2177 = vmatprep.subr.bf16.mxu0 0
      %2178 = vmatpush1.bf16.msra.mxu0 0
      %2179 = vmatprep.subr.bf16.mxu0 0
      %2180 = vmatpush1.bf16.msra.mxu0 0
      %2181 = vmatprep.subr.bf16.mxu0 0
      %2182 = vmatpush1.bf16.msra.mxu0 0
      %2183 = vmatprep.subr.bf16.mxu0 0
      %2184 = vmatpush1.bf16.msra.mxu0 0
      %2185 = vmatprep.subr.bf16.mxu0 0
      %2186 = vmatpush1.bf16.msra.mxu0 0
      %2187 = vmatprep.subr.bf16.mxu0 0
      %2188 = vmatpush1.bf16.msra.mxu0 0
      %2189 = vmatprep.subr.bf16.mxu0 0
      %2190 = vmatpush1.bf16.msra.mxu0 0
      %2191 = vmatprep.subr.bf16.mxu0 0
      %2192 = vmatpush1.bf16.msra.mxu0 0
      %2193 = vmatprep.subr.bf16.mxu0 0
      %2194 = vmatpush1.bf16.msra.mxu0 0
      %2195 = vmatprep.subr.bf16.mxu0 0
      %2196 = vmatpush1.bf16.msra.mxu0 0
      %2197 = vmatprep.subr.bf16.mxu0 0
      %2198 = vmatpush1.bf16.msra.mxu0 0
      %2199 = vmatprep.subr.bf16.mxu0 0
      %2200 = vmatpush1.bf16.msra.mxu0 0
      %2201 = vmatprep.subr.bf16.mxu0 0
      %2202 = vmatpush1.bf16.msra.mxu0 0
      %2203 = vmatprep.mubr.bf16.mxu0 0
      %2204 = vmatmul.mubr.bf16.gmra.mrb[0].mxu0 %v2169
      %v2205 = vpop.f32.mrb[0].mxu0
      %v2206 = vadd.f32 0.0, %v2205
      %v2207 = vpop.f32.mrb[0].mxu0
      %v2208 = vpop.f32.mrb[0].mxu0
      %v2209 = vadd.f32 0.0, %v2208
      %v2210 = vpop.f32.mrb[0].mxu0
      %2211 = vdwg.mxu0
      %v2212 = vadd.f32 %v2158, %v2206
      %v2213 = vadd.f32 %v2159, %v2209
      %vm2214 = vcmp.ge.f32.partialorder %v2212, 0.0
      %vm2215 = vcmp.ge.f32.partialorder %v2213, 0.0
      %v2216 = vmul.f32 %v2212, 0.3
      %v2217 = vmul.f32 %v2213, 0.3
      %v2218 = vsel %vm2214, %v2212, %v2216
      %v2219 = vsel %vm2215, %v2213, %v2217
      %v2220 = vld [vmem:[%s3] sm:$0xff]
      %v2221 = vld [vmem:[%s3 + $0x8] sm:$0xff]
      %v2222 = vmul.f32 %v2218, %v2220
      %v2223 = vmul.f32 %v2219, %v2221
      %vm2224 = vcmask 261120
      %v2225 = vsel %vm2224, %v2222, 0.0
      %2226 = vadd.xlane.f32.xlu0 %v2225
      %v2227 = vpop.xlane.xlu0 %2226
      %v2228 = vsel %vm2224, %v2223, 0.0
      %2229 = vadd.xlane.f32.xlu0 %v2228
      %v2230 = vpop.xlane.xlu0 %2229
      %v2231 = vadd.f32 %v2227, %v2230
      %v2232 = vrot.slane %v2231, 4
      %v2233 = vadd.f32 %v2231, %v2232
      %v2234 = vrot.slane %v2233, 2
      %v2235 = vadd.f32 %v2233, %v2234
      %v2236 = vrot.slane %v2235, 1
      %v2237 = vadd.f32 %v2235, %v2236
      %2238 = vst [vmem:[%s193] sm:$0x1] %v2237
      %p2239 = scmp.lt.s32.totalorder %s15, 1
      %s2240 = scalar_select %p2239, %s15, 1
      %s2241 = scalar_lea.vmem %s4, %s2240
      // Predicated region
      $region37: #{discriminator_forward.1} parent=35 // pred_check
        %p2242 = pneg %p122
      $region38: #{discriminator_forward.1} parent=35 // pred_check_branch
        %2244 = sbr.rel (%p2242) target = $region40
      $region39: #{discriminator_forward.1} parent=35 // pred_region
        _
      $region40: #{discriminator_forward.1} parent=35 // pred_fallthru
        _
    $region36: #{discriminator_forward.1} parent=5 // pred_fallthru
      _
    %p2245 = scmp.le.s32.totalorder 2, %s10
    // Predicated region
    $region41: #{discriminator_forward.1} parent=5 // pred_check
      %p2246 = pneg %p2245
    $region42: #{discriminator_forward.1} parent=5 // pred_check_branch
      %2248 = sbr.rel (%p2246) target = $region44
    $region43: #{discriminator_forward.1} parent=5 // pred_region
      %s2249 = ssub.s32 %s10, 2
      // Predicated region
      $region45: #{discriminator_forward.1} parent=43 // pred_check
        %p2250 = pneg %p128
      $region46: #{discriminator_forward.1} parent=43 // pred_check_branch
        %2252 = sbr.rel (%p2250) target = $region48
      $region47: #{discriminator_forward.1} parent=43 // pred_region
        %p2253 = scmp.lt.s32.totalorder %s16, 1
        %s2254 = scalar_select %p2253, %s16, 1
        %s2255 = scalar_lea.vmem %s4, %s2254
      $region48: #{discriminator_forward.1} parent=43 // pred_fallthru
        _
    $region44: #{discriminator_forward.1} parent=5 // pred_fallthru
      _
  $region6: #{discriminator_forward.1} parent=0 // loop_footer
    %s14 = sadd.s32 1, %s10
  $region7: #{discriminator_forward.1} parent=0 // loop_footer_branch
    %9 = sbr.rel target = $region3
  $region8: #{discriminator_forward.1} parent=0 // loop_exit
    _

</llo_original>
